<compile_context>
chip_gen: v7x
topology: tpu7x:2x2x1
jax: 0.10.0
libtpu: 0.0.40
codegen_flags: <defaults>
</compile_context>

<pallas_src>
import functools

import jax
import jax.numpy as jnp
from jax.experimental import pallas as pl
from jax.experimental.pallas import tpu as pltpu


def _lfm_kernel(users_ref, items_ref,          # SMEM scalar-prefetch: (B_pad,) int32 each
                uemb_hbm, iemb_hbm,            # pl.ANY (HBM): (n_users, F), (n_items, F)
                bias_ref,                      # VMEM block: (1, TB) pre-summed biases
                out_ref,                       # VMEM block: (1, TB) lane-dense output
                ue_buf, ui_buf,                # VMEM scratch: (TB, F) gathered factor rows
                sem):                          # DMA semaphores: (2,)
    t = pl.program_id(0)
    tb = ue_buf.shape[0]
    base = t * tb

    # Issue all row-gather DMAs for this batch tile (fused embedding gather).
    @pl.loop(0, tb)
    def _issue(r):
        u = users_ref[base + r]
        it = items_ref[base + r]
        pltpu.make_async_copy(
            uemb_hbm.at[pl.ds(u, 1)], ue_buf.at[pl.ds(r, 1)], sem.at[0]).start()
        pltpu.make_async_copy(
            iemb_hbm.at[pl.ds(it, 1)], ui_buf.at[pl.ds(r, 1)], sem.at[1]).start()

    # Drain: one wait per issued copy (identical row shape -> identical signal).
    @pl.loop(0, tb)
    def _drain(r):
        pltpu.make_async_copy(
            uemb_hbm.at[pl.ds(0, 1)], ue_buf.at[pl.ds(0, 1)], sem.at[0]).wait()
        pltpu.make_async_copy(
            iemb_hbm.at[pl.ds(0, 1)], ui_buf.at[pl.ds(0, 1)], sem.at[1]).wait()

    # VPU multiply + XLU lane reduce over the factor axis (no MXU).
    dot = jnp.sum(ue_buf[...] * ui_buf[...], axis=1)          # (TB,)
    out_ref[...] = bias_ref[...] + dot[None, :]               # (1, TB) lane-dense store


def lfm_forward(params, users, items, *, tile_b=512):
    """Pallas-backed LFM forward. users/items: int (B,). Returns (B,) float32."""
    user_emb, item_emb, user_bias, item_bias = params
    _, F = user_emb.shape
    B = users.shape[0]

    users = users.astype(jnp.int32)
    items = items.astype(jnp.int32)

    # Biases are negligible traffic (4 B/row vs 8*F B/row of factors): pre-add
    # them in JAX and feed lane-dense to the kernel.
    bias = user_bias[users, 0] + item_bias[items, 0]          # (B,)

    # Batch tile: multiple of 128 lanes, capped at 512 rows (fits comfortably
    # inside v7x's 32 MiB scoped-VMEM default even at large F).
    TB = min(tile_b, pl.next_power_of_2(max(B, 128)))
    num_tiles = pl.cdiv(B, TB)
    B_pad = num_tiles * TB
    pad = B_pad - B

    users_p = jnp.pad(users, (0, pad))                        # pad index 0 is valid
    items_p = jnp.pad(items, (0, pad))
    bias_p = jnp.pad(bias, (0, pad)).reshape(1, B_pad)

    grid_spec = pltpu.PrefetchScalarGridSpec(
        num_scalar_prefetch=2,
        grid=(num_tiles,),
        in_specs=[
            pl.BlockSpec(memory_space=pl.ANY),                         # user factor table (HBM)
            pl.BlockSpec(memory_space=pl.ANY),                         # item factor table (HBM)
            pl.BlockSpec((1, TB), lambda t, users, items: (0, t)),     # pre-summed biases
        ],
        out_specs=pl.BlockSpec((1, TB), lambda t, users, items: (0, t)),
        scratch_shapes=[
            pltpu.VMEM((TB, F), user_emb.dtype),
            pltpu.VMEM((TB, F), item_emb.dtype),
            pltpu.SemaphoreType.DMA((2,)),
        ],
    )

    itemsize = 4  # float32 params
    cost = pl.CostEstimate(
        flops=2 * B_pad * F,
        transcendentals=0,
        bytes_accessed=2 * B_pad * F * itemsize + 4 * B_pad * itemsize,
    )

    out = pl.pallas_call(
        _lfm_kernel,
        out_shape=jax.ShapeDtypeStruct((1, B_pad), jnp.float32),
        grid_spec=grid_spec,
        compiler_params=pltpu.CompilerParams(
            dimension_semantics=("parallel",),
            vmem_limit_bytes=32 * 1024 * 1024,
        ),
        cost_estimate=cost,
    )(users_p, items_p, user_emb, item_emb, bias_p)

    # preds.squeeze()
    return out[0, :B]


def init_lfm_params(key, n_users, n_items, n_factors):
    """Deterministic synthetic init matching nn.Embedding shapes (N(0,1))."""
    k1, k2, k3, k4 = jax.random.split(key, 4)
    user_emb = jax.random.normal(k1, (n_users, n_factors), dtype=jnp.float32)
    item_emb = jax.random.normal(k2, (n_items, n_factors), dtype=jnp.float32)
    user_bias = jax.random.normal(k3, (n_users, 1), dtype=jnp.float32)
    item_bias = jax.random.normal(k4, (n_items, 1), dtype=jnp.float32)
    return user_emb, item_emb, user_bias, item_bias


if __name__ == "__main__":
    key = jax.random.PRNGKey(0)

    n_users, n_items, n_factors = 16, 24, 32
    batch = 8

    params = init_lfm_params(key, n_users, n_items, n_factors)

    ku, ki = jax.random.split(jax.random.PRNGKey(0), 2)
    users = jax.random.randint(ku, (batch,), 0, n_users, dtype=jnp.int32)
    items = jax.random.randint(ki, (batch,), 0, n_items, dtype=jnp.int32)

    fwd = jax.jit(functools.partial(lfm_forward))
    preds = fwd(params, users, items)
    preds = jax.block_until_ready(preds)

    # Pure-JAX reference of the same forward, for a silent correctness check.
    user_emb, item_emb, user_bias, item_bias = params
    ref = (
        user_bias[users, 0]
        + item_bias[items, 0]
        + jnp.sum(user_emb[users] * item_emb[items], axis=1)
    )
    assert preds.shape == (batch,)
    assert jnp.allclose(preds, ref, atol=1e-5, rtol=1e-5)

    print("KERNEL_OK")
</pallas_src>

<mosaic_0001>
module attributes {stable_mosaic.version = 11 : i64} {
  func.func @_lfm_kernel(%arg0: i32, %arg1: memref<128xi32, #tpu.memory_space<smem>>, %arg2: memref<128xi32, #tpu.memory_space<smem>>, %arg3: memref<16x32xf32, #tpu.memory_space<any>>, %arg4: memref<24x32xf32, #tpu.memory_space<any>>, %arg5: memref<1x128xf32, #tpu.memory_space<vmem>>, %arg6: memref<1x128xf32, #tpu.memory_space<vmem>>, %arg7: memref<128x32xf32, #tpu.memory_space<vmem>>, %arg8: memref<128x32xf32, #tpu.memory_space<vmem>>, %arg9: memref<2x!tpu.dma_semaphore, #tpu.memory_space<semaphore_mem>>) attributes {dimension_semantics = [#tpu.dimension_semantics<parallel>], iteration_bounds = array<i64: 1>, scalar_prefetch = 2 : i64, scratch_operands = 3 : i64, tpu.core_type = #tpu.core_type<tc>, window_params = [{}, {}, {transform_indices = @transform_2, window_bounds = array<i64: 1, 128>}, {transform_indices = @transform_3, window_bounds = array<i64: 1, 128>}]} {
    %c128_i32 = arith.constant 128 : i32
    %0 = arith.muli %arg0, %c128_i32 : i32
    %c0_i32 = arith.constant 0 : i32
    %c128_i32_0 = arith.constant 128 : i32
    %1 = arith.addi %c0_i32, %c128_i32_0 : i32
    %c1_i32 = arith.constant 1 : i32
    scf.for %arg10 = %c0_i32 to %1 step %c1_i32  : i32 {
      %c1_i32_12 = arith.constant 1 : i32
      %11 = arith.muli %arg10, %c1_i32_12 : i32
      %c0_i32_13 = arith.constant 0 : i32
      %12 = arith.addi %c0_i32_13, %11 : i32
      %13 = arith.addi %0, %12 : i32
      %14 = arith.index_cast %13 : i32 to index
      %15 = memref.load %arg1[%14] : memref<128xi32, #tpu.memory_space<smem>>
      %16 = arith.addi %0, %12 : i32
      %17 = arith.index_cast %16 : i32 to index
      %18 = memref.load %arg2[%17] : memref<128xi32, #tpu.memory_space<smem>>
      %c0_i32_14 = arith.constant 0 : i32
      %c0_i32_15 = arith.constant 0 : i32
      %19 = tpu.memref_slice %arg3[%15, %c0_i32_15] : memref<16x32xf32, #tpu.memory_space<any>> -> memref<1x32xf32, #tpu.memory_space<any>>
      %c0_i32_16 = arith.constant 0 : i32
      %20 = tpu.memref_slice %arg7[%12, %c0_i32_16] : memref<128x32xf32, #tpu.memory_space<vmem>> -> memref<1x32xf32, #tpu.memory_space<vmem>>
      %21 = tpu.memref_slice %arg9[%c0_i32_14] : memref<2x!tpu.dma_semaphore, #tpu.memory_space<semaphore_mem>> -> memref<1x!tpu.dma_semaphore, #tpu.memory_space<semaphore_mem>>
      %22 = tpu.memref_squeeze %21 : memref<1x!tpu.dma_semaphore, #tpu.memory_space<semaphore_mem>> -> memref<!tpu.dma_semaphore, #tpu.memory_space<semaphore_mem>>
      tpu.enqueue_dma source(%19 : memref<1x32xf32, #tpu.memory_space<any>>) target(%20 : memref<1x32xf32, #tpu.memory_space<vmem>>) target_semaphore(%22 : memref<!tpu.dma_semaphore, #tpu.memory_space<semaphore_mem>>)
      %c1_i32_17 = arith.constant 1 : i32
      %c0_i32_18 = arith.constant 0 : i32
      %23 = tpu.memref_slice %arg4[%18, %c0_i32_18] : memref<24x32xf32, #tpu.memory_space<any>> -> memref<1x32xf32, #tpu.memory_space<any>>
      %c0_i32_19 = arith.constant 0 : i32
      %24 = tpu.memref_slice %arg8[%12, %c0_i32_19] : memref<128x32xf32, #tpu.memory_space<vmem>> -> memref<1x32xf32, #tpu.memory_space<vmem>>
      %25 = tpu.memref_slice %arg9[%c1_i32_17] : memref<2x!tpu.dma_semaphore, #tpu.memory_space<semaphore_mem>> -> memref<1x!tpu.dma_semaphore, #tpu.memory_space<semaphore_mem>>
      %26 = tpu.memref_squeeze %25 : memref<1x!tpu.dma_semaphore, #tpu.memory_space<semaphore_mem>> -> memref<!tpu.dma_semaphore, #tpu.memory_space<semaphore_mem>>
      tpu.enqueue_dma source(%23 : memref<1x32xf32, #tpu.memory_space<any>>) target(%24 : memref<1x32xf32, #tpu.memory_space<vmem>>) target_semaphore(%26 : memref<!tpu.dma_semaphore, #tpu.memory_space<semaphore_mem>>)
    }
    %c128_i32_1 = arith.constant 128 : i32
    %c0_i32_2 = arith.constant 0 : i32
    %c128_i32_3 = arith.constant 128 : i32
    %2 = arith.addi %c0_i32_2, %c128_i32_3 : i32
    %c1_i32_4 = arith.constant 1 : i32
    scf.for %arg10 = %c0_i32_2 to %2 step %c1_i32_4  : i32 {
      %c0_i32_12 = arith.constant 0 : i32
      %c0_i32_13 = arith.constant 0 : i32
      %c0_i32_14 = arith.constant 0 : i32
      %11 = tpu.memref_slice %arg3[%c0_i32_13, %c0_i32_14] : memref<16x32xf32, #tpu.memory_space<any>> -> memref<1x32xf32, #tpu.memory_space<any>>
      %c0_i32_15 = arith.constant 0 : i32
      %c0_i32_16 = arith.constant 0 : i32
      %12 = tpu.memref_slice %arg7[%c0_i32_15, %c0_i32_16] : memref<128x32xf32, #tpu.memory_space<vmem>> -> memref<1x32xf32, #tpu.memory_space<vmem>>
      %13 = tpu.memref_slice %arg9[%c0_i32_12] : memref<2x!tpu.dma_semaphore, #tpu.memory_space<semaphore_mem>> -> memref<1x!tpu.dma_semaphore, #tpu.memory_space<semaphore_mem>>
      %14 = tpu.memref_squeeze %13 : memref<1x!tpu.dma_semaphore, #tpu.memory_space<semaphore_mem>> -> memref<!tpu.dma_semaphore, #tpu.memory_space<semaphore_mem>>
      tpu.wait_dma2 semaphore(%14 : memref<!tpu.dma_semaphore, #tpu.memory_space<semaphore_mem>>) src(%11 : memref<1x32xf32, #tpu.memory_space<any>>) dst(%12 : memref<1x32xf32, #tpu.memory_space<vmem>>)
      %c1_i32_17 = arith.constant 1 : i32
      %c0_i32_18 = arith.constant 0 : i32
      %c0_i32_19 = arith.constant 0 : i32
      %15 = tpu.memref_slice %arg4[%c0_i32_18, %c0_i32_19] : memref<24x32xf32, #tpu.memory_space<any>> -> memref<1x32xf32, #tpu.memory_space<any>>
      %c0_i32_20 = arith.constant 0 : i32
      %c0_i32_21 = arith.constant 0 : i32
      %16 = tpu.memref_slice %arg8[%c0_i32_20, %c0_i32_21] : memref<128x32xf32, #tpu.memory_space<vmem>> -> memref<1x32xf32, #tpu.memory_space<vmem>>
      %17 = tpu.memref_slice %arg9[%c1_i32_17] : memref<2x!tpu.dma_semaphore, #tpu.memory_space<semaphore_mem>> -> memref<1x!tpu.dma_semaphore, #tpu.memory_space<semaphore_mem>>
      %18 = tpu.memref_squeeze %17 : memref<1x!tpu.dma_semaphore, #tpu.memory_space<semaphore_mem>> -> memref<!tpu.dma_semaphore, #tpu.memory_space<semaphore_mem>>
      tpu.wait_dma2 semaphore(%18 : memref<!tpu.dma_semaphore, #tpu.memory_space<semaphore_mem>>) src(%15 : memref<1x32xf32, #tpu.memory_space<any>>) dst(%16 : memref<1x32xf32, #tpu.memory_space<vmem>>)
    }
    %c0 = arith.constant 0 : index
    %c0_5 = arith.constant 0 : index
    %3 = vector.load %arg7[%c0, %c0_5] : memref<128x32xf32, #tpu.memory_space<vmem>>, vector<128x32xf32>
    %c0_6 = arith.constant 0 : index
    %c0_7 = arith.constant 0 : index
    %4 = vector.load %arg8[%c0_6, %c0_7] : memref<128x32xf32, #tpu.memory_space<vmem>>, vector<128x32xf32>
    %5 = arith.mulf %3, %4 : vector<128x32xf32>
    %cst = arith.constant dense<0.000000e+00> : vector<128xf32>
    %6 = vector.multi_reduction <add>, %5, %cst [1] : vector<128x32xf32> to vector<128xf32>
    %c0_8 = arith.constant 0 : index
    %c0_9 = arith.constant 0 : index
    %7 = vector.load %arg5[%c0_8, %c0_9] : memref<1x128xf32, #tpu.memory_space<vmem>>, vector<1x128xf32>
    %8 = vector.shape_cast %6 : vector<128xf32> to vector<1x128xf32>
    %9 = arith.addf %7, %8 : vector<1x128xf32>
    %c0_10 = arith.constant 0 : index
    %c0_11 = arith.constant 0 : index
    %10 = vector.load %arg6[%c0_10, %c0_11] : memref<1x128xf32, #tpu.memory_space<vmem>>, vector<1x128xf32>
    tpu.vector_store %arg6[%c0_10, %c0_11], %9 {strides = array<i32>} : memref<1x128xf32, #tpu.memory_space<vmem>>, vector<1x128xf32>,
    return
  }
  func.func @transform_2(%arg0: i32, %arg1: memref<128xi32, #tpu.memory_space<smem>>, %arg2: memref<128xi32, #tpu.memory_space<smem>>) -> (i32, i32) {
    %c0_i32 = arith.constant 0 : i32
    %c0_i32_0 = arith.constant 0 : i32
    return %c0_i32, %arg0 : i32, i32
  }
  func.func @transform_3(%arg0: i32, %arg1: memref<128xi32, #tpu.memory_space<smem>>, %arg2: memref<128xi32, #tpu.memory_space<smem>>) -> (i32, i32) {
    %c0_i32 = arith.constant 0 : i32
    %c0_i32_0 = arith.constant 0 : i32
    return %c0_i32, %arg0 : i32, i32
  }
}

</mosaic_0001>

<llo_original>
// kernel: lfm_forward.1
$region0: #{lfm_forward.1}
  #allocation0 [shape = 'u32[]', space=smem, size = 0x4, offset = 0x4, fixed_abs, tag = 'smem constant byte address 0x4 - core index']
  #allocation1 [shape = 'u32[144,128]{1,0:T(1,128)}', space=vmem, size = 0x12000, scoped, tag = 'internal scratch']
  #allocation2 [shape = 'f32[128,32]{1,0:T(8,128)}', space=vmem, size = 0x10000, scoped, tag = 'scratch operand']
  #allocation3 [shape = 'f32[128,32]{1,0:T(8,128)}', space=vmem, size = 0x10000, scoped, tag = 'scratch operand']
  #allocation4 [shape = 's32[2]{0}', space=sflag, size = 0x8, scoped, tag = 'scratch operand']
  #allocation5 [shape = 's32[1]{0}', space=sflag, size = 0x4, scoped, tag = 'scoped memory for lfm_forward.1']
  #allocation6 [shape = 'u8[512]{0}', space=smem, size = 0x200, scoped, tag = 'prefetched SMEM operand 0']
  #allocation7 [shape = 'u8[512]{0}', space=smem, size = 0x200, scoped, tag = 'prefetched SMEM operand 1']
  #allocation8 [shape = 's32[]', space=sflag, size = 0x4, offset = 0, fixed_abs, tag = 'sflag constant byte address 0x0 - dummy sync flag']
  #allocation9 [shape = 's32[]', space=sflag, size = 0x4, offset = 0, fixed_abs, tag = 'sflag constant byte address 0x0 - dummy sync flag']
  %s0 = inlined_call_operand.vmem [shape: s32[128], index: 0, kind: input, shape index: {}]
  %s1 = inlined_call_operand.vmem [shape: s32[128], index: 1, kind: input, shape index: {}]
  %s2 = inlined_call_operand.vmem [shape: f32[16,32], index: 2, kind: input, shape index: {}]
  %s3 = inlined_call_operand.vmem [shape: f32[24,32], index: 3, kind: input, shape index: {}]
  %s4 = inlined_call_operand.vmem [shape: f32[1,128], index: 4, kind: input, shape index: {}]
  %s5 = inlined_call_operand.vmem [shape: f32[1,128], index: 5, kind: output, shape index: {}]
  %s6 = sld [smem:[#allocation0]]
  $region88: #{lfm_forward.1} parent=0
    _
  %s8 = ssub.s32 1, %s6
  %s9 = scalar_select 0, %s8, %s6
  %s10 = sshll.u32 %s0, 4
  %s11 = int_to_ptr.vmem [resolvable:$true] %s10
  %13 = dma.vmem_to_smem %s11, 16, [#allocation6], [#allocation5]
  %s14 = sshll.u32 %s1, 4
  %s15 = int_to_ptr.vmem [resolvable:$true] %s14
  %17 = dma.vmem_to_smem %s15, 16, [#allocation7], [#allocation5]
  %18 = dma.done [#allocation5], 32
  %19 = sfence
  // Predicated region
  $region2: #{lfm_forward.1} parent=0 // pred_check
    _
  $region3: #{lfm_forward.1} parent=0 // pred_check_branch
    %21 = sbr.rel (0) target = $region5
  $region4: #{lfm_forward.1} parent=0 // pred_region
    _
  $region5: #{lfm_forward.1} parent=0 // pred_fallthru
    _
  %s22 = smul.u32 0, 128
  loop: start=0, step=1, limit=128
  $region6: #{lfm_forward.1} parent=0 // loop_pre_header
    _
  $region7: #{lfm_forward.1} parent=0 // loop_header
    %s24 = sphi 0, %s28
    %p25 = scmp.ge.s32.totalorder %s24, 128
  $region8: #{lfm_forward.1} parent=0 // loop_header_branch
    %27 = sbr.rel (%p25) target = $region12
  $region9: #{lfm_forward.1} parent=0 // loop_body
    %s29 = sadd.s32 %s22, %s24
    %s30 = sld [smem:[#allocation6 + %s29]]
    %s31 = sld [smem:[#allocation7 + %s29]]
    %s32 = scalar_lea.vmem %s2, %s30
    %s33 = scalar_lea.vmem [#allocation2], %s24
    %p35 = scmp.lt.u32.totalorder 1, 8
    %p36 = pneg %p35
    // Predicated region
    $region13: #{lfm_forward.1} parent=9 // pred_check
      _
    $region14: #{lfm_forward.1} parent=9 // pred_check_branch
      %38 = sbr.rel (%p35) target = $region16
    $region15: #{lfm_forward.1} parent=9 // pred_region
      %s53 = sand.u32 1, 7
      %p54 = scmp.eq.s32.totalorder %s53, 0
      %p55 = pneg %p54
      // Predicated region
      $region28: #{lfm_forward.1} parent=15 // pred_check
        _
      $region29: #{lfm_forward.1} parent=15 // pred_check_branch
        %57 = sbr.rel (%p54) target = $region31
      $region30: #{lfm_forward.1} parent=15 // pred_region
        %s58 = sand.u32 1, 7
        %s59 = ssub.s32 1, %s58
        %s60 = scalar_lea.vmem %s32, %s59
        %s61 = ssub.s32 1, %s58
        %s62 = scalar_lea.vmem %s33, %s61 [#allocation2]
        %s63 = sshllo.u32 0, %s58
        loop: start=0, step=1, limit=1
        $region32: #{lfm_forward.1} parent=30 // loop_pre_header
          _
        $region33: #{lfm_forward.1} parent=30 // loop_header
          %s65 = sphi 0, %s69
          %p66 = scmp.ge.s32.totalorder %s65, 1
          %s70 = sphi %s60, %s60
          %s71 = sphi %s62, %s62
        $region34: #{lfm_forward.1} parent=30 // loop_header_branch
          %68 = sbr.rel (%p66) target = $region38
        $region35: #{lfm_forward.1} parent=30 // loop_body
          %v72 = vld [vmem:[%s70] sm:%s63]
          %73 = vst [vmem:[%s71] sm:%s63] %v72
        $region36: #{lfm_forward.1} parent=30 // loop_footer
          %s69 = sadd.s32 1, %s65
        $region37: #{lfm_forward.1} parent=30 // loop_footer_branch
          %64 = sbr.rel target = $region33
        $region38: #{lfm_forward.1} parent=30 // loop_exit
          _
      $region31: #{lfm_forward.1} parent=15 // pred_fallthru
        _
    $region16: #{lfm_forward.1} parent=9 // pred_fallthru
      _
    // Predicated region
    $region17: #{lfm_forward.1} parent=9 // pred_check
      %p39 = pneg %p35
    $region18: #{lfm_forward.1} parent=9 // pred_check_branch
      %41 = sbr.rel (%p39) target = $region20
    $region19: #{lfm_forward.1} parent=9 // pred_region
      %s42 = sshllo.u32 0, 1
      loop: start=0, step=1, limit=1
      $region21: #{lfm_forward.1} parent=19 // loop_pre_header
        _
      $region22: #{lfm_forward.1} parent=19 // loop_header
        %s44 = sphi 0, %s48
        %p45 = scmp.ge.s32.totalorder %s44, 1
        %s49 = sphi %s32, %s32
        %s50 = sphi %s33, %s33
      $region23: #{lfm_forward.1} parent=19 // loop_header_branch
        %47 = sbr.rel (%p45) target = $region27
      $region24: #{lfm_forward.1} parent=19 // loop_body
        %v51 = vld [vmem:[%s49] sm:%s42]
        %52 = vst [vmem:[%s50] sm:%s42] %v51
      $region25: #{lfm_forward.1} parent=19 // loop_footer
        %s48 = sadd.s32 1, %s44
      $region26: #{lfm_forward.1} parent=19 // loop_footer_branch
        %43 = sbr.rel target = $region22
      $region27: #{lfm_forward.1} parent=19 // loop_exit
        _
    $region20: #{lfm_forward.1} parent=9 // pred_fallthru
      _
    // Predicated region
    $region39: #{lfm_forward.1} parent=9 // pred_check
      _
    $region40: #{lfm_forward.1} parent=9 // pred_check_branch
      %76 = sbr.rel (0) target = $region42
    $region41: #{lfm_forward.1} parent=9 // pred_region
      %77 = vsyncadd [#allocation4], 16
    $region42: #{lfm_forward.1} parent=9 // pred_fallthru
      _
    %s78 = scalar_lea.vmem %s3, %s31
    %s79 = scalar_lea.vmem [#allocation3], %s24
    %s80 = scalar_lea.sflag [#allocation4], 1
    %p82 = scmp.lt.u32.totalorder 1, 8
    %p83 = pneg %p82
    // Predicated region
    $region43: #{lfm_forward.1} parent=9 // pred_check
      _
    $region44: #{lfm_forward.1} parent=9 // pred_check_branch
      %85 = sbr.rel (%p82) target = $region46
    $region45: #{lfm_forward.1} parent=9 // pred_region
      %s100 = sand.u32 1, 7
      %p101 = scmp.eq.s32.totalorder %s100, 0
      %p102 = pneg %p101
      // Predicated region
      $region58: #{lfm_forward.1} parent=45 // pred_check
        _
      $region59: #{lfm_forward.1} parent=45 // pred_check_branch
        %104 = sbr.rel (%p101) target = $region61
      $region60: #{lfm_forward.1} parent=45 // pred_region
        %s105 = sand.u32 1, 7
        %s106 = ssub.s32 1, %s105
        %s107 = scalar_lea.vmem %s78, %s106
        %s108 = ssub.s32 1, %s105
        %s109 = scalar_lea.vmem %s79, %s108 [#allocation3]
        %s110 = sshllo.u32 0, %s105
        loop: start=0, step=1, limit=1
        $region62: #{lfm_forward.1} parent=60 // loop_pre_header
          _
        $region63: #{lfm_forward.1} parent=60 // loop_header
          %s112 = sphi 0, %s116
          %p113 = scmp.ge.s32.totalorder %s112, 1
          %s117 = sphi %s107, %s107
          %s118 = sphi %s109, %s109
        $region64: #{lfm_forward.1} parent=60 // loop_header_branch
          %115 = sbr.rel (%p113) target = $region68
        $region65: #{lfm_forward.1} parent=60 // loop_body
          %v119 = vld [vmem:[%s117] sm:%s110]
          %120 = vst [vmem:[%s118] sm:%s110] %v119
        $region66: #{lfm_forward.1} parent=60 // loop_footer
          %s116 = sadd.s32 1, %s112
        $region67: #{lfm_forward.1} parent=60 // loop_footer_branch
          %111 = sbr.rel target = $region63
        $region68: #{lfm_forward.1} parent=60 // loop_exit
          _
      $region61: #{lfm_forward.1} parent=45 // pred_fallthru
        _
    $region46: #{lfm_forward.1} parent=9 // pred_fallthru
      _
    // Predicated region
    $region47: #{lfm_forward.1} parent=9 // pred_check
      %p86 = pneg %p82
    $region48: #{lfm_forward.1} parent=9 // pred_check_branch
      %88 = sbr.rel (%p86) target = $region50
    $region49: #{lfm_forward.1} parent=9 // pred_region
      %s89 = sshllo.u32 0, 1
      loop: start=0, step=1, limit=1
      $region51: #{lfm_forward.1} parent=49 // loop_pre_header
        _
      $region52: #{lfm_forward.1} parent=49 // loop_header
        %s91 = sphi 0, %s95
        %p92 = scmp.ge.s32.totalorder %s91, 1
        %s96 = sphi %s78, %s78
        %s97 = sphi %s79, %s79
      $region53: #{lfm_forward.1} parent=49 // loop_header_branch
        %94 = sbr.rel (%p92) target = $region57
      $region54: #{lfm_forward.1} parent=49 // loop_body
        %v98 = vld [vmem:[%s96] sm:%s89]
        %99 = vst [vmem:[%s97] sm:%s89] %v98
      $region55: #{lfm_forward.1} parent=49 // loop_footer
        %s95 = sadd.s32 1, %s91
      $region56: #{lfm_forward.1} parent=49 // loop_footer_branch
        %90 = sbr.rel target = $region52
      $region57: #{lfm_forward.1} parent=49 // loop_exit
        _
    $region50: #{lfm_forward.1} parent=9 // pred_fallthru
      _
    // Predicated region
    $region69: #{lfm_forward.1} parent=9 // pred_check
      _
    $region70: #{lfm_forward.1} parent=9 // pred_check_branch
      %123 = sbr.rel (0) target = $region72
    $region71: #{lfm_forward.1} parent=9 // pred_region
      %124 = vsyncadd %s80, 16
    $region72: #{lfm_forward.1} parent=9 // pred_fallthru
      _
  $region10: #{lfm_forward.1} parent=0 // loop_footer
    %s28 = sadd.s32 1, %s24
  $region11: #{lfm_forward.1} parent=0 // loop_footer_branch
    %23 = sbr.rel target = $region7
  $region12: #{lfm_forward.1} parent=0 // loop_exit
    _
  loop: start=0, step=1, limit=128
  $region73: #{lfm_forward.1} parent=0 // loop_pre_header
    _
  $region74: #{lfm_forward.1} parent=0 // loop_header
    %s126 = sphi 0, %s130
    %p127 = scmp.ge.s32.totalorder %s126, 128
  $region75: #{lfm_forward.1} parent=0 // loop_header_branch
    %129 = sbr.rel (%p127) target = $region79
  $region76: #{lfm_forward.1} parent=0 // loop_body
    %s131 = smul.u32 1, 1
    %s132 = sshll.u32 %s131, 4
    %133 = dma.done [#allocation4], %s132
    %s134 = scalar_lea.sflag [#allocation4], 1
    %s135 = sshll.u32 %s131, 4
    %136 = dma.done %s134, %s135
  $region77: #{lfm_forward.1} parent=0 // loop_footer
    %s130 = sadd.s32 1, %s126
  $region78: #{lfm_forward.1} parent=0 // loop_footer_branch
    %125 = sbr.rel target = $region74
  $region79: #{lfm_forward.1} parent=0 // loop_exit
    _
  %v137 = vld [vmem:[#allocation2] sm:$0xff]
  %v138 = vld [vmem:[#allocation2 + $0x8] sm:$0xff]
  %v139 = vld [vmem:[#allocation2 + $0x10] sm:$0xff]
  %v140 = vld [vmem:[#allocation2 + $0x18] sm:$0xff]
  %v141 = vld [vmem:[#allocation2 + $0x20] sm:$0xff]
  %v142 = vld [vmem:[#allocation2 + $0x28] sm:$0xff]
  %v143 = vld [vmem:[#allocation2 + $0x30] sm:$0xff]
  %v144 = vld [vmem:[#allocation2 + $0x38] sm:$0xff]
  %v145 = vld [vmem:[#allocation2 + $0x40] sm:$0xff]
  %v146 = vld [vmem:[#allocation2 + $0x48] sm:$0xff]
  %v147 = vld [vmem:[#allocation2 + $0x50] sm:$0xff]
  %v148 = vld [vmem:[#allocation2 + $0x58] sm:$0xff]
  %v149 = vld [vmem:[#allocation2 + $0x60] sm:$0xff]
  %v150 = vld [vmem:[#allocation2 + $0x68] sm:$0xff]
  %v151 = vld [vmem:[#allocation2 + $0x70] sm:$0xff]
  %v152 = vld [vmem:[#allocation2 + $0x78] sm:$0xff]
  %v153 = vld [vmem:[#allocation3] sm:$0xff]
  %v154 = vld [vmem:[#allocation3 + $0x8] sm:$0xff]
  %v155 = vld [vmem:[#allocation3 + $0x10] sm:$0xff]
  %v156 = vld [vmem:[#allocation3 + $0x18] sm:$0xff]
  %v157 = vld [vmem:[#allocation3 + $0x20] sm:$0xff]
  %v158 = vld [vmem:[#allocation3 + $0x28] sm:$0xff]
  %v159 = vld [vmem:[#allocation3 + $0x30] sm:$0xff]
  %v160 = vld [vmem:[#allocation3 + $0x38] sm:$0xff]
  %v161 = vld [vmem:[#allocation3 + $0x40] sm:$0xff]
  %v162 = vld [vmem:[#allocation3 + $0x48] sm:$0xff]
  %v163 = vld [vmem:[#allocation3 + $0x50] sm:$0xff]
  %v164 = vld [vmem:[#allocation3 + $0x58] sm:$0xff]
  %v165 = vld [vmem:[#allocation3 + $0x60] sm:$0xff]
  %v166 = vld [vmem:[#allocation3 + $0x68] sm:$0xff]
  %v167 = vld [vmem:[#allocation3 + $0x70] sm:$0xff]
  %v168 = vld [vmem:[#allocation3 + $0x78] sm:$0xff]
  %v169 = vmul.f32 %v137, %v153
  %v170 = vmul.f32 %v138, %v154
  %v171 = vmul.f32 %v139, %v155
  %v172 = vmul.f32 %v140, %v156
  %v173 = vmul.f32 %v141, %v157
  %v174 = vmul.f32 %v142, %v158
  %v175 = vmul.f32 %v143, %v159
  %v176 = vmul.f32 %v144, %v160
  %v177 = vmul.f32 %v145, %v161
  %v178 = vmul.f32 %v146, %v162
  %v179 = vmul.f32 %v147, %v163
  %v180 = vmul.f32 %v148, %v164
  %v181 = vmul.f32 %v149, %v165
  %v182 = vmul.f32 %v150, %v166
  %v183 = vmul.f32 %v151, %v167
  %v184 = vmul.f32 %v152, %v168
  %vm185 = vcmask 261120
  %v186 = vsel %vm185, %v169, 0.0
  %187 = vadd.xlane.f32.xlu0 %v186
  %v188 = vpop.xlane.xlu0 %187
  %v189 = vsel %vm185, %v170, 0.0
  %190 = vadd.xlane.f32.xlu0 %v189
  %v191 = vpop.xlane.xlu0 %190
  %v192 = vsel %vm185, %v171, 0.0
  %193 = vadd.xlane.f32.xlu0 %v192
  %v194 = vpop.xlane.xlu0 %193
  %v195 = vsel %vm185, %v172, 0.0
  %196 = vadd.xlane.f32.xlu0 %v195
  %v197 = vpop.xlane.xlu0 %196
  %v198 = vsel %vm185, %v173, 0.0
  %199 = vadd.xlane.f32.xlu0 %v198
  %v200 = vpop.xlane.xlu0 %199
  %v201 = vsel %vm185, %v174, 0.0
  %202 = vadd.xlane.f32.xlu0 %v201
  %v203 = vpop.xlane.xlu0 %202
  %v204 = vsel %vm185, %v175, 0.0
  %205 = vadd.xlane.f32.xlu0 %v204
  %v206 = vpop.xlane.xlu0 %205
  %v207 = vsel %vm185, %v176, 0.0
  %208 = vadd.xlane.f32.xlu0 %v207
  %v209 = vpop.xlane.xlu0 %208
  %v210 = vsel %vm185, %v177, 0.0
  %211 = vadd.xlane.f32.xlu0 %v210
  %v212 = vpop.xlane.xlu0 %211
  %v213 = vsel %vm185, %v178, 0.0
  %214 = vadd.xlane.f32.xlu0 %v213
  %v215 = vpop.xlane.xlu0 %214
  %v216 = vsel %vm185, %v179, 0.0
  %217 = vadd.xlane.f32.xlu0 %v216
  %v218 = vpop.xlane.xlu0 %217
  %v219 = vsel %vm185, %v180, 0.0
  %220 = vadd.xlane.f32.xlu0 %v219
  %v221 = vpop.xlane.xlu0 %220
  %v222 = vsel %vm185, %v181, 0.0
  %223 = vadd.xlane.f32.xlu0 %v222
  %v224 = vpop.xlane.xlu0 %223
  %v225 = vsel %vm185, %v182, 0.0
  %226 = vadd.xlane.f32.xlu0 %v225
  %v227 = vpop.xlane.xlu0 %226
  %v228 = vsel %vm185, %v183, 0.0
  %229 = vadd.xlane.f32.xlu0 %v228
  %v230 = vpop.xlane.xlu0 %229
  %v231 = vsel %vm185, %v184, 0.0
  %232 = vadd.xlane.f32.xlu0 %v231
  %v233 = vpop.xlane.xlu0 %232
  %v234 = vld [vmem:[%s4] sm:$0x1]
  %v251 = vlaneseq
  %v252 = vshrl.u32 %v251, 7
  %v253 = vsub.s32 0, %v252
  %v254 = vrot.slane %v188, %v253
  %v255 = vlaneseq
  %v256 = vshrl.u32 %v255, 7
  %v257 = vsub.s32 1, %v256
  %v258 = vrot.slane %v188, %v257
  %v259 = vlaneseq
  %v260 = vshrl.u32 %v259, 7
  %v261 = vsub.s32 2, %v260
  %v262 = vrot.slane %v188, %v261
  %v263 = vlaneseq
  %v264 = vshrl.u32 %v263, 7
  %v265 = vsub.s32 3, %v264
  %v266 = vrot.slane %v188, %v265
  %v267 = vlaneseq
  %v268 = vshrl.u32 %v267, 7
  %v269 = vsub.s32 4, %v268
  %v270 = vrot.slane %v188, %v269
  %v271 = vlaneseq
  %v272 = vshrl.u32 %v271, 7
  %v273 = vsub.s32 5, %v272
  %v274 = vrot.slane %v188, %v273
  %v275 = vlaneseq
  %v276 = vshrl.u32 %v275, 7
  %v277 = vsub.s32 6, %v276
  %v278 = vrot.slane %v188, %v277
  %v279 = vlaneseq
  %v280 = vshrl.u32 %v279, 7
  %v281 = vsub.s32 7, %v280
  %v282 = vrot.slane %v188, %v281
  %v283 = vlaneseq
  %v284 = vshrl.u32 %v283, 7
  %v285 = vsub.s32 0, %v284
  %v286 = vrot.slane %v191, %v285
  %v287 = vlaneseq
  %v288 = vshrl.u32 %v287, 7
  %v289 = vsub.s32 1, %v288
  %v290 = vrot.slane %v191, %v289
  %v291 = vlaneseq
  %v292 = vshrl.u32 %v291, 7
  %v293 = vsub.s32 2, %v292
  %v294 = vrot.slane %v191, %v293
  %v295 = vlaneseq
  %v296 = vshrl.u32 %v295, 7
  %v297 = vsub.s32 3, %v296
  %v298 = vrot.slane %v191, %v297
  %v299 = vlaneseq
  %v300 = vshrl.u32 %v299, 7
  %v301 = vsub.s32 4, %v300
  %v302 = vrot.slane %v191, %v301
  %v303 = vlaneseq
  %v304 = vshrl.u32 %v303, 7
  %v305 = vsub.s32 5, %v304
  %v306 = vrot.slane %v191, %v305
  %v307 = vlaneseq
  %v308 = vshrl.u32 %v307, 7
  %v309 = vsub.s32 6, %v308
  %v310 = vrot.slane %v191, %v309
  %v311 = vlaneseq
  %v312 = vshrl.u32 %v311, 7
  %v313 = vsub.s32 7, %v312
  %v314 = vrot.slane %v191, %v313
  %v315 = vlaneseq
  %v316 = vshrl.u32 %v315, 7
  %v317 = vsub.s32 0, %v316
  %v318 = vrot.slane %v194, %v317
  %v319 = vlaneseq
  %v320 = vshrl.u32 %v319, 7
  %v321 = vsub.s32 1, %v320
  %v322 = vrot.slane %v194, %v321
  %v323 = vlaneseq
  %v324 = vshrl.u32 %v323, 7
  %v325 = vsub.s32 2, %v324
  %v326 = vrot.slane %v194, %v325
  %v327 = vlaneseq
  %v328 = vshrl.u32 %v327, 7
  %v329 = vsub.s32 3, %v328
  %v330 = vrot.slane %v194, %v329
  %v331 = vlaneseq
  %v332 = vshrl.u32 %v331, 7
  %v333 = vsub.s32 4, %v332
  %v334 = vrot.slane %v194, %v333
  %v335 = vlaneseq
  %v336 = vshrl.u32 %v335, 7
  %v337 = vsub.s32 5, %v336
  %v338 = vrot.slane %v194, %v337
  %v339 = vlaneseq
  %v340 = vshrl.u32 %v339, 7
  %v341 = vsub.s32 6, %v340
  %v342 = vrot.slane %v194, %v341
  %v343 = vlaneseq
  %v344 = vshrl.u32 %v343, 7
  %v345 = vsub.s32 7, %v344
  %v346 = vrot.slane %v194, %v345
  %v347 = vlaneseq
  %v348 = vshrl.u32 %v347, 7
  %v349 = vsub.s32 0, %v348
  %v350 = vrot.slane %v197, %v349
  %v351 = vlaneseq
  %v352 = vshrl.u32 %v351, 7
  %v353 = vsub.s32 1, %v352
  %v354 = vrot.slane %v197, %v353
  %v355 = vlaneseq
  %v356 = vshrl.u32 %v355, 7
  %v357 = vsub.s32 2, %v356
  %v358 = vrot.slane %v197, %v357
  %v359 = vlaneseq
  %v360 = vshrl.u32 %v359, 7
  %v361 = vsub.s32 3, %v360
  %v362 = vrot.slane %v197, %v361
  %v363 = vlaneseq
  %v364 = vshrl.u32 %v363, 7
  %v365 = vsub.s32 4, %v364
  %v366 = vrot.slane %v197, %v365
  %v367 = vlaneseq
  %v368 = vshrl.u32 %v367, 7
  %v369 = vsub.s32 5, %v368
  %v370 = vrot.slane %v197, %v369
  %v371 = vlaneseq
  %v372 = vshrl.u32 %v371, 7
  %v373 = vsub.s32 6, %v372
  %v374 = vrot.slane %v197, %v373
  %v375 = vlaneseq
  %v376 = vshrl.u32 %v375, 7
  %v377 = vsub.s32 7, %v376
  %v378 = vrot.slane %v197, %v377
  %v379 = vlaneseq
  %v380 = vshrl.u32 %v379, 7
  %v381 = vsub.s32 0, %v380
  %v382 = vrot.slane %v200, %v381
  %v383 = vlaneseq
  %v384 = vshrl.u32 %v383, 7
  %v385 = vsub.s32 1, %v384
  %v386 = vrot.slane %v200, %v385
  %v387 = vlaneseq
  %v388 = vshrl.u32 %v387, 7
  %v389 = vsub.s32 2, %v388
  %v390 = vrot.slane %v200, %v389
  %v391 = vlaneseq
  %v392 = vshrl.u32 %v391, 7
  %v393 = vsub.s32 3, %v392
  %v394 = vrot.slane %v200, %v393
  %v395 = vlaneseq
  %v396 = vshrl.u32 %v395, 7
  %v397 = vsub.s32 4, %v396
  %v398 = vrot.slane %v200, %v397
  %v399 = vlaneseq
  %v400 = vshrl.u32 %v399, 7
  %v401 = vsub.s32 5, %v400
  %v402 = vrot.slane %v200, %v401
  %v403 = vlaneseq
  %v404 = vshrl.u32 %v403, 7
  %v405 = vsub.s32 6, %v404
  %v406 = vrot.slane %v200, %v405
  %v407 = vlaneseq
  %v408 = vshrl.u32 %v407, 7
  %v409 = vsub.s32 7, %v408
  %v410 = vrot.slane %v200, %v409
  %v411 = vlaneseq
  %v412 = vshrl.u32 %v411, 7
  %v413 = vsub.s32 0, %v412
  %v414 = vrot.slane %v203, %v413
  %v415 = vlaneseq
  %v416 = vshrl.u32 %v415, 7
  %v417 = vsub.s32 1, %v416
  %v418 = vrot.slane %v203, %v417
  %v419 = vlaneseq
  %v420 = vshrl.u32 %v419, 7
  %v421 = vsub.s32 2, %v420
  %v422 = vrot.slane %v203, %v421
  %v423 = vlaneseq
  %v424 = vshrl.u32 %v423, 7
  %v425 = vsub.s32 3, %v424
  %v426 = vrot.slane %v203, %v425
  %v427 = vlaneseq
  %v428 = vshrl.u32 %v427, 7
  %v429 = vsub.s32 4, %v428
  %v430 = vrot.slane %v203, %v429
  %v431 = vlaneseq
  %v432 = vshrl.u32 %v431, 7
  %v433 = vsub.s32 5, %v432
  %v434 = vrot.slane %v203, %v433
  %v435 = vlaneseq
  %v436 = vshrl.u32 %v435, 7
  %v437 = vsub.s32 6, %v436
  %v438 = vrot.slane %v203, %v437
  %v439 = vlaneseq
  %v440 = vshrl.u32 %v439, 7
  %v441 = vsub.s32 7, %v440
  %v442 = vrot.slane %v203, %v441
  %v443 = vlaneseq
  %v444 = vshrl.u32 %v443, 7
  %v445 = vsub.s32 0, %v444
  %v446 = vrot.slane %v206, %v445
  %v447 = vlaneseq
  %v448 = vshrl.u32 %v447, 7
  %v449 = vsub.s32 1, %v448
  %v450 = vrot.slane %v206, %v449
  %v451 = vlaneseq
  %v452 = vshrl.u32 %v451, 7
  %v453 = vsub.s32 2, %v452
  %v454 = vrot.slane %v206, %v453
  %v455 = vlaneseq
  %v456 = vshrl.u32 %v455, 7
  %v457 = vsub.s32 3, %v456
  %v458 = vrot.slane %v206, %v457
  %v459 = vlaneseq
  %v460 = vshrl.u32 %v459, 7
  %v461 = vsub.s32 4, %v460
  %v462 = vrot.slane %v206, %v461
  %v463 = vlaneseq
  %v464 = vshrl.u32 %v463, 7
  %v465 = vsub.s32 5, %v464
  %v466 = vrot.slane %v206, %v465
  %v467 = vlaneseq
  %v468 = vshrl.u32 %v467, 7
  %v469 = vsub.s32 6, %v468
  %v470 = vrot.slane %v206, %v469
  %v471 = vlaneseq
  %v472 = vshrl.u32 %v471, 7
  %v473 = vsub.s32 7, %v472
  %v474 = vrot.slane %v206, %v473
  %v475 = vlaneseq
  %v476 = vshrl.u32 %v475, 7
  %v477 = vsub.s32 0, %v476
  %v478 = vrot.slane %v209, %v477
  %v479 = vlaneseq
  %v480 = vshrl.u32 %v479, 7
  %v481 = vsub.s32 1, %v480
  %v482 = vrot.slane %v209, %v481
  %v483 = vlaneseq
  %v484 = vshrl.u32 %v483, 7
  %v485 = vsub.s32 2, %v484
  %v486 = vrot.slane %v209, %v485
  %v487 = vlaneseq
  %v488 = vshrl.u32 %v487, 7
  %v489 = vsub.s32 3, %v488
  %v490 = vrot.slane %v209, %v489
  %v491 = vlaneseq
  %v492 = vshrl.u32 %v491, 7
  %v493 = vsub.s32 4, %v492
  %v494 = vrot.slane %v209, %v493
  %v495 = vlaneseq
  %v496 = vshrl.u32 %v495, 7
  %v497 = vsub.s32 5, %v496
  %v498 = vrot.slane %v209, %v497
  %v499 = vlaneseq
  %v500 = vshrl.u32 %v499, 7
  %v501 = vsub.s32 6, %v500
  %v502 = vrot.slane %v209, %v501
  %v503 = vlaneseq
  %v504 = vshrl.u32 %v503, 7
  %v505 = vsub.s32 7, %v504
  %v506 = vrot.slane %v209, %v505
  %v507 = vlaneseq
  %v508 = vshrl.u32 %v507, 7
  %v509 = vsub.s32 0, %v508
  %v510 = vrot.slane %v212, %v509
  %v511 = vlaneseq
  %v512 = vshrl.u32 %v511, 7
  %v513 = vsub.s32 1, %v512
  %v514 = vrot.slane %v212, %v513
  %v515 = vlaneseq
  %v516 = vshrl.u32 %v515, 7
  %v517 = vsub.s32 2, %v516
  %v518 = vrot.slane %v212, %v517
  %v519 = vlaneseq
  %v520 = vshrl.u32 %v519, 7
  %v521 = vsub.s32 3, %v520
  %v522 = vrot.slane %v212, %v521
  %v523 = vlaneseq
  %v524 = vshrl.u32 %v523, 7
  %v525 = vsub.s32 4, %v524
  %v526 = vrot.slane %v212, %v525
  %v527 = vlaneseq
  %v528 = vshrl.u32 %v527, 7
  %v529 = vsub.s32 5, %v528
  %v530 = vrot.slane %v212, %v529
  %v531 = vlaneseq
  %v532 = vshrl.u32 %v531, 7
  %v533 = vsub.s32 6, %v532
  %v534 = vrot.slane %v212, %v533
  %v535 = vlaneseq
  %v536 = vshrl.u32 %v535, 7
  %v537 = vsub.s32 7, %v536
  %v538 = vrot.slane %v212, %v537
  %v539 = vlaneseq
  %v540 = vshrl.u32 %v539, 7
  %v541 = vsub.s32 0, %v540
  %v542 = vrot.slane %v215, %v541
  %v543 = vlaneseq
  %v544 = vshrl.u32 %v543, 7
  %v545 = vsub.s32 1, %v544
  %v546 = vrot.slane %v215, %v545
  %v547 = vlaneseq
  %v548 = vshrl.u32 %v547, 7
  %v549 = vsub.s32 2, %v548
  %v550 = vrot.slane %v215, %v549
  %v551 = vlaneseq
  %v552 = vshrl.u32 %v551, 7
  %v553 = vsub.s32 3, %v552
  %v554 = vrot.slane %v215, %v553
  %v555 = vlaneseq
  %v556 = vshrl.u32 %v555, 7
  %v557 = vsub.s32 4, %v556
  %v558 = vrot.slane %v215, %v557
  %v559 = vlaneseq
  %v560 = vshrl.u32 %v559, 7
  %v561 = vsub.s32 5, %v560
  %v562 = vrot.slane %v215, %v561
  %v563 = vlaneseq
  %v564 = vshrl.u32 %v563, 7
  %v565 = vsub.s32 6, %v564
  %v566 = vrot.slane %v215, %v565
  %v567 = vlaneseq
  %v568 = vshrl.u32 %v567, 7
  %v569 = vsub.s32 7, %v568
  %v570 = vrot.slane %v215, %v569
  %v571 = vlaneseq
  %v572 = vshrl.u32 %v571, 7
  %v573 = vsub.s32 0, %v572
  %v574 = vrot.slane %v218, %v573
  %v575 = vlaneseq
  %v576 = vshrl.u32 %v575, 7
  %v577 = vsub.s32 1, %v576
  %v578 = vrot.slane %v218, %v577
  %v579 = vlaneseq
  %v580 = vshrl.u32 %v579, 7
  %v581 = vsub.s32 2, %v580
  %v582 = vrot.slane %v218, %v581
  %v583 = vlaneseq
  %v584 = vshrl.u32 %v583, 7
  %v585 = vsub.s32 3, %v584
  %v586 = vrot.slane %v218, %v585
  %v587 = vlaneseq
  %v588 = vshrl.u32 %v587, 7
  %v589 = vsub.s32 4, %v588
  %v590 = vrot.slane %v218, %v589
  %v591 = vlaneseq
  %v592 = vshrl.u32 %v591, 7
  %v593 = vsub.s32 5, %v592
  %v594 = vrot.slane %v218, %v593
  %v595 = vlaneseq
  %v596 = vshrl.u32 %v595, 7
  %v597 = vsub.s32 6, %v596
  %v598 = vrot.slane %v218, %v597
  %v599 = vlaneseq
  %v600 = vshrl.u32 %v599, 7
  %v601 = vsub.s32 7, %v600
  %v602 = vrot.slane %v218, %v601
  %v603 = vlaneseq
  %v604 = vshrl.u32 %v603, 7
  %v605 = vsub.s32 0, %v604
  %v606 = vrot.slane %v221, %v605
  %v607 = vlaneseq
  %v608 = vshrl.u32 %v607, 7
  %v609 = vsub.s32 1, %v608
  %v610 = vrot.slane %v221, %v609
  %v611 = vlaneseq
  %v612 = vshrl.u32 %v611, 7
  %v613 = vsub.s32 2, %v612
  %v614 = vrot.slane %v221, %v613
  %v615 = vlaneseq
  %v616 = vshrl.u32 %v615, 7
  %v617 = vsub.s32 3, %v616
  %v618 = vrot.slane %v221, %v617
  %v619 = vlaneseq
  %v620 = vshrl.u32 %v619, 7
  %v621 = vsub.s32 4, %v620
  %v622 = vrot.slane %v221, %v621
  %v623 = vlaneseq
  %v624 = vshrl.u32 %v623, 7
  %v625 = vsub.s32 5, %v624
  %v626 = vrot.slane %v221, %v625
  %v627 = vlaneseq
  %v628 = vshrl.u32 %v627, 7
  %v629 = vsub.s32 6, %v628
  %v630 = vrot.slane %v221, %v629
  %v631 = vlaneseq
  %v632 = vshrl.u32 %v631, 7
  %v633 = vsub.s32 7, %v632
  %v634 = vrot.slane %v221, %v633
  %v635 = vlaneseq
  %v636 = vshrl.u32 %v635, 7
  %v637 = vsub.s32 0, %v636
  %v638 = vrot.slane %v224, %v637
  %v639 = vlaneseq
  %v640 = vshrl.u32 %v639, 7
  %v641 = vsub.s32 1, %v640
  %v642 = vrot.slane %v224, %v641
  %v643 = vlaneseq
  %v644 = vshrl.u32 %v643, 7
  %v645 = vsub.s32 2, %v644
  %v646 = vrot.slane %v224, %v645
  %v647 = vlaneseq
  %v648 = vshrl.u32 %v647, 7
  %v649 = vsub.s32 3, %v648
  %v650 = vrot.slane %v224, %v649
  %v651 = vlaneseq
  %v652 = vshrl.u32 %v651, 7
  %v653 = vsub.s32 4, %v652
  %v654 = vrot.slane %v224, %v653
  %v655 = vlaneseq
  %v656 = vshrl.u32 %v655, 7
  %v657 = vsub.s32 5, %v656
  %v658 = vrot.slane %v224, %v657
  %v659 = vlaneseq
  %v660 = vshrl.u32 %v659, 7
  %v661 = vsub.s32 6, %v660
  %v662 = vrot.slane %v224, %v661
  %v663 = vlaneseq
  %v664 = vshrl.u32 %v663, 7
  %v665 = vsub.s32 7, %v664
  %v666 = vrot.slane %v224, %v665
  %v667 = vlaneseq
  %v668 = vshrl.u32 %v667, 7
  %v669 = vsub.s32 0, %v668
  %v670 = vrot.slane %v227, %v669
  %v671 = vlaneseq
  %v672 = vshrl.u32 %v671, 7
  %v673 = vsub.s32 1, %v672
  %v674 = vrot.slane %v227, %v673
  %v675 = vlaneseq
  %v676 = vshrl.u32 %v675, 7
  %v677 = vsub.s32 2, %v676
  %v678 = vrot.slane %v227, %v677
  %v679 = vlaneseq
  %v680 = vshrl.u32 %v679, 7
  %v681 = vsub.s32 3, %v680
  %v682 = vrot.slane %v227, %v681
  %v683 = vlaneseq
  %v684 = vshrl.u32 %v683, 7
  %v685 = vsub.s32 4, %v684
  %v686 = vrot.slane %v227, %v685
  %v687 = vlaneseq
  %v688 = vshrl.u32 %v687, 7
  %v689 = vsub.s32 5, %v688
  %v690 = vrot.slane %v227, %v689
  %v691 = vlaneseq
  %v692 = vshrl.u32 %v691, 7
  %v693 = vsub.s32 6, %v692
  %v694 = vrot.slane %v227, %v693
  %v695 = vlaneseq
  %v696 = vshrl.u32 %v695, 7
  %v697 = vsub.s32 7, %v696
  %v698 = vrot.slane %v227, %v697
  %v699 = vlaneseq
  %v700 = vshrl.u32 %v699, 7
  %v701 = vsub.s32 0, %v700
  %v702 = vrot.slane %v230, %v701
  %v703 = vlaneseq
  %v704 = vshrl.u32 %v703, 7
  %v705 = vsub.s32 1, %v704
  %v706 = vrot.slane %v230, %v705
  %v707 = vlaneseq
  %v708 = vshrl.u32 %v707, 7
  %v709 = vsub.s32 2, %v708
  %v710 = vrot.slane %v230, %v709
  %v711 = vlaneseq
  %v712 = vshrl.u32 %v711, 7
  %v713 = vsub.s32 3, %v712
  %v714 = vrot.slane %v230, %v713
  %v715 = vlaneseq
  %v716 = vshrl.u32 %v715, 7
  %v717 = vsub.s32 4, %v716
  %v718 = vrot.slane %v230, %v717
  %v719 = vlaneseq
  %v720 = vshrl.u32 %v719, 7
  %v721 = vsub.s32 5, %v720
  %v722 = vrot.slane %v230, %v721
  %v723 = vlaneseq
  %v724 = vshrl.u32 %v723, 7
  %v725 = vsub.s32 6, %v724
  %v726 = vrot.slane %v230, %v725
  %v727 = vlaneseq
  %v728 = vshrl.u32 %v727, 7
  %v729 = vsub.s32 7, %v728
  %v730 = vrot.slane %v230, %v729
  %v731 = vlaneseq
  %v732 = vshrl.u32 %v731, 7
  %v733 = vsub.s32 0, %v732
  %v734 = vrot.slane %v233, %v733
  %v735 = vlaneseq
  %v736 = vshrl.u32 %v735, 7
  %v737 = vsub.s32 1, %v736
  %v738 = vrot.slane %v233, %v737
  %v739 = vlaneseq
  %v740 = vshrl.u32 %v739, 7
  %v741 = vsub.s32 2, %v740
  %v742 = vrot.slane %v233, %v741
  %v743 = vlaneseq
  %v744 = vshrl.u32 %v743, 7
  %v745 = vsub.s32 3, %v744
  %v746 = vrot.slane %v233, %v745
  %v747 = vlaneseq
  %v748 = vshrl.u32 %v747, 7
  %v749 = vsub.s32 4, %v748
  %v750 = vrot.slane %v233, %v749
  %v751 = vlaneseq
  %v752 = vshrl.u32 %v751, 7
  %v753 = vsub.s32 5, %v752
  %v754 = vrot.slane %v233, %v753
  %v755 = vlaneseq
  %v756 = vshrl.u32 %v755, 7
  %v757 = vsub.s32 6, %v756
  %v758 = vrot.slane %v233, %v757
  %v759 = vlaneseq
  %v760 = vshrl.u32 %v759, 7
  %v761 = vsub.s32 7, %v760
  %v762 = vrot.slane %v233, %v761
  %v763 = vcombine.low %v254, %v258
  %v764 = vcombine.low %v262, %v266
  %v765 = vcombine.low %v270, %v274
  %v766 = vcombine.low %v278, %v282
  %v768 = vunpack.c.l.s4 1966171168
  %v769 = vunpack.c.0.s8 %v768
  %v770 = vlaneseq
  %v771 = vshrl.u32 %v770, 7
  %v772 = vsub.s32 %v769, %v771
  %v773 = vrot.slane %v763, %v772
  %v775 = vunpack.c.l.s4 1966171168
  %v776 = vunpack.c.0.s8 %v775
  %v777 = vlaneseq
  %v778 = vshrl.u32 %v777, 7
  %v779 = vsub.s32 %v776, %v778
  %v780 = vrot.slane %v764, %v779
  %v782 = vunpack.c.l.s4 1966171168
  %v783 = vunpack.c.0.s8 %v782
  %v784 = vlaneseq
  %v785 = vshrl.u32 %v784, 7
  %v786 = vsub.s32 %v783, %v785
  %v787 = vrot.slane %v765, %v786
  %v789 = vunpack.c.l.s4 1966171168
  %v790 = vunpack.c.0.s8 %v789
  %v791 = vlaneseq
  %v792 = vshrl.u32 %v791, 7
  %v793 = vsub.s32 %v790, %v792
  %v794 = vrot.slane %v766, %v793
  %v795 = vcombine.low %v773, %v780
  %v796 = vcombine.low %v787, %v794
  %v798 = vunpack.c.l.s4 1966171168
  %v799 = vunpack.c.0.s8 %v798
  %v800 = vlaneseq
  %v801 = vshrl.u32 %v800, 7
  %v802 = vsub.s32 %v799, %v801
  %v803 = vrot.slane %v795, %v802
  %v805 = vunpack.c.l.s4 1966171168
  %v806 = vunpack.c.0.s8 %v805
  %v807 = vlaneseq
  %v808 = vshrl.u32 %v807, 7
  %v809 = vsub.s32 %v806, %v808
  %v810 = vrot.slane %v796, %v809
  %v811 = vcombine.low %v803, %v810
  %v812 = vcombine.low %v286, %v290
  %v813 = vcombine.low %v294, %v298
  %v814 = vcombine.low %v302, %v306
  %v815 = vcombine.low %v310, %v314
  %v817 = vunpack.c.l.s4 1966171168
  %v818 = vunpack.c.0.s8 %v817
  %v819 = vlaneseq
  %v820 = vshrl.u32 %v819, 7
  %v821 = vsub.s32 %v818, %v820
  %v822 = vrot.slane %v812, %v821
  %v824 = vunpack.c.l.s4 1966171168
  %v825 = vunpack.c.0.s8 %v824
  %v826 = vlaneseq
  %v827 = vshrl.u32 %v826, 7
  %v828 = vsub.s32 %v825, %v827
  %v829 = vrot.slane %v813, %v828
  %v831 = vunpack.c.l.s4 1966171168
  %v832 = vunpack.c.0.s8 %v831
  %v833 = vlaneseq
  %v834 = vshrl.u32 %v833, 7
  %v835 = vsub.s32 %v832, %v834
  %v836 = vrot.slane %v814, %v835
  %v838 = vunpack.c.l.s4 1966171168
  %v839 = vunpack.c.0.s8 %v838
  %v840 = vlaneseq
  %v841 = vshrl.u32 %v840, 7
  %v842 = vsub.s32 %v839, %v841
  %v843 = vrot.slane %v815, %v842
  %v844 = vcombine.low %v822, %v829
  %v845 = vcombine.low %v836, %v843
  %v847 = vunpack.c.l.s4 1966171168
  %v848 = vunpack.c.0.s8 %v847
  %v849 = vlaneseq
  %v850 = vshrl.u32 %v849, 7
  %v851 = vsub.s32 %v848, %v850
  %v852 = vrot.slane %v844, %v851
  %v854 = vunpack.c.l.s4 1966171168
  %v855 = vunpack.c.0.s8 %v854
  %v856 = vlaneseq
  %v857 = vshrl.u32 %v856, 7
  %v858 = vsub.s32 %v855, %v857
  %v859 = vrot.slane %v845, %v858
  %v860 = vcombine.low %v852, %v859
  %v861 = vcombine.low %v318, %v322
  %v862 = vcombine.low %v326, %v330
  %v863 = vcombine.low %v334, %v338
  %v864 = vcombine.low %v342, %v346
  %v866 = vunpack.c.l.s4 1966171168
  %v867 = vunpack.c.0.s8 %v866
  %v868 = vlaneseq
  %v869 = vshrl.u32 %v868, 7
  %v870 = vsub.s32 %v867, %v869
  %v871 = vrot.slane %v861, %v870
  %v873 = vunpack.c.l.s4 1966171168
  %v874 = vunpack.c.0.s8 %v873
  %v875 = vlaneseq
  %v876 = vshrl.u32 %v875, 7
  %v877 = vsub.s32 %v874, %v876
  %v878 = vrot.slane %v862, %v877
  %v880 = vunpack.c.l.s4 1966171168
  %v881 = vunpack.c.0.s8 %v880
  %v882 = vlaneseq
  %v883 = vshrl.u32 %v882, 7
  %v884 = vsub.s32 %v881, %v883
  %v885 = vrot.slane %v863, %v884
  %v887 = vunpack.c.l.s4 1966171168
  %v888 = vunpack.c.0.s8 %v887
  %v889 = vlaneseq
  %v890 = vshrl.u32 %v889, 7
  %v891 = vsub.s32 %v888, %v890
  %v892 = vrot.slane %v864, %v891
  %v893 = vcombine.low %v871, %v878
  %v894 = vcombine.low %v885, %v892
  %v896 = vunpack.c.l.s4 1966171168
  %v897 = vunpack.c.0.s8 %v896
  %v898 = vlaneseq
  %v899 = vshrl.u32 %v898, 7
  %v900 = vsub.s32 %v897, %v899
  %v901 = vrot.slane %v893, %v900
  %v903 = vunpack.c.l.s4 1966171168
  %v904 = vunpack.c.0.s8 %v903
  %v905 = vlaneseq
  %v906 = vshrl.u32 %v905, 7
  %v907 = vsub.s32 %v904, %v906
  %v908 = vrot.slane %v894, %v907
  %v909 = vcombine.low %v901, %v908
  %v910 = vcombine.low %v350, %v354
  %v911 = vcombine.low %v358, %v362
  %v912 = vcombine.low %v366, %v370
  %v913 = vcombine.low %v374, %v378
  %v915 = vunpack.c.l.s4 1966171168
  %v916 = vunpack.c.0.s8 %v915
  %v917 = vlaneseq
  %v918 = vshrl.u32 %v917, 7
  %v919 = vsub.s32 %v916, %v918
  %v920 = vrot.slane %v910, %v919
  %v922 = vunpack.c.l.s4 1966171168
  %v923 = vunpack.c.0.s8 %v922
  %v924 = vlaneseq
  %v925 = vshrl.u32 %v924, 7
  %v926 = vsub.s32 %v923, %v925
  %v927 = vrot.slane %v911, %v926
  %v929 = vunpack.c.l.s4 1966171168
  %v930 = vunpack.c.0.s8 %v929
  %v931 = vlaneseq
  %v932 = vshrl.u32 %v931, 7
  %v933 = vsub.s32 %v930, %v932
  %v934 = vrot.slane %v912, %v933
  %v936 = vunpack.c.l.s4 1966171168
  %v937 = vunpack.c.0.s8 %v936
  %v938 = vlaneseq
  %v939 = vshrl.u32 %v938, 7
  %v940 = vsub.s32 %v937, %v939
  %v941 = vrot.slane %v913, %v940
  %v942 = vcombine.low %v920, %v927
  %v943 = vcombine.low %v934, %v941
  %v945 = vunpack.c.l.s4 1966171168
  %v946 = vunpack.c.0.s8 %v945
  %v947 = vlaneseq
  %v948 = vshrl.u32 %v947, 7
  %v949 = vsub.s32 %v946, %v948
  %v950 = vrot.slane %v942, %v949
  %v952 = vunpack.c.l.s4 1966171168
  %v953 = vunpack.c.0.s8 %v952
  %v954 = vlaneseq
  %v955 = vshrl.u32 %v954, 7
  %v956 = vsub.s32 %v953, %v955
  %v957 = vrot.slane %v943, %v956
  %v958 = vcombine.low %v950, %v957
  %v959 = vcombine.low %v382, %v386
  %v960 = vcombine.low %v390, %v394
  %v961 = vcombine.low %v398, %v402
  %v962 = vcombine.low %v406, %v410
  %v964 = vunpack.c.l.s4 1966171168
  %v965 = vunpack.c.0.s8 %v964
  %v966 = vlaneseq
  %v967 = vshrl.u32 %v966, 7
  %v968 = vsub.s32 %v965, %v967
  %v969 = vrot.slane %v959, %v968
  %v971 = vunpack.c.l.s4 1966171168
  %v972 = vunpack.c.0.s8 %v971
  %v973 = vlaneseq
  %v974 = vshrl.u32 %v973, 7
  %v975 = vsub.s32 %v972, %v974
  %v976 = vrot.slane %v960, %v975
  %v978 = vunpack.c.l.s4 1966171168
  %v979 = vunpack.c.0.s8 %v978
  %v980 = vlaneseq
  %v981 = vshrl.u32 %v980, 7
  %v982 = vsub.s32 %v979, %v981
  %v983 = vrot.slane %v961, %v982
  %v985 = vunpack.c.l.s4 1966171168
  %v986 = vunpack.c.0.s8 %v985
  %v987 = vlaneseq
  %v988 = vshrl.u32 %v987, 7
  %v989 = vsub.s32 %v986, %v988
  %v990 = vrot.slane %v962, %v989
  %v991 = vcombine.low %v969, %v976
  %v992 = vcombine.low %v983, %v990
  %v994 = vunpack.c.l.s4 1966171168
  %v995 = vunpack.c.0.s8 %v994
  %v996 = vlaneseq
  %v997 = vshrl.u32 %v996, 7
  %v998 = vsub.s32 %v995, %v997
  %v999 = vrot.slane %v991, %v998
  %v1001 = vunpack.c.l.s4 1966171168
  %v1002 = vunpack.c.0.s8 %v1001
  %v1003 = vlaneseq
  %v1004 = vshrl.u32 %v1003, 7
  %v1005 = vsub.s32 %v1002, %v1004
  %v1006 = vrot.slane %v992, %v1005
  %v1007 = vcombine.low %v999, %v1006
  %v1008 = vcombine.low %v414, %v418
  %v1009 = vcombine.low %v422, %v426
  %v1010 = vcombine.low %v430, %v434
  %v1011 = vcombine.low %v438, %v442
  %v1013 = vunpack.c.l.s4 1966171168
  %v1014 = vunpack.c.0.s8 %v1013
  %v1015 = vlaneseq
  %v1016 = vshrl.u32 %v1015, 7
  %v1017 = vsub.s32 %v1014, %v1016
  %v1018 = vrot.slane %v1008, %v1017
  %v1020 = vunpack.c.l.s4 1966171168
  %v1021 = vunpack.c.0.s8 %v1020
  %v1022 = vlaneseq
  %v1023 = vshrl.u32 %v1022, 7
  %v1024 = vsub.s32 %v1021, %v1023
  %v1025 = vrot.slane %v1009, %v1024
  %v1027 = vunpack.c.l.s4 1966171168
  %v1028 = vunpack.c.0.s8 %v1027
  %v1029 = vlaneseq
  %v1030 = vshrl.u32 %v1029, 7
  %v1031 = vsub.s32 %v1028, %v1030
  %v1032 = vrot.slane %v1010, %v1031
  %v1034 = vunpack.c.l.s4 1966171168
  %v1035 = vunpack.c.0.s8 %v1034
  %v1036 = vlaneseq
  %v1037 = vshrl.u32 %v1036, 7
  %v1038 = vsub.s32 %v1035, %v1037
  %v1039 = vrot.slane %v1011, %v1038
  %v1040 = vcombine.low %v1018, %v1025
  %v1041 = vcombine.low %v1032, %v1039
  %v1043 = vunpack.c.l.s4 1966171168
  %v1044 = vunpack.c.0.s8 %v1043
  %v1045 = vlaneseq
  %v1046 = vshrl.u32 %v1045, 7
  %v1047 = vsub.s32 %v1044, %v1046
  %v1048 = vrot.slane %v1040, %v1047
  %v1050 = vunpack.c.l.s4 1966171168
  %v1051 = vunpack.c.0.s8 %v1050
  %v1052 = vlaneseq
  %v1053 = vshrl.u32 %v1052, 7
  %v1054 = vsub.s32 %v1051, %v1053
  %v1055 = vrot.slane %v1041, %v1054
  %v1056 = vcombine.low %v1048, %v1055
  %v1057 = vcombine.low %v446, %v450
  %v1058 = vcombine.low %v454, %v458
  %v1059 = vcombine.low %v462, %v466
  %v1060 = vcombine.low %v470, %v474
  %v1062 = vunpack.c.l.s4 1966171168
  %v1063 = vunpack.c.0.s8 %v1062
  %v1064 = vlaneseq
  %v1065 = vshrl.u32 %v1064, 7
  %v1066 = vsub.s32 %v1063, %v1065
  %v1067 = vrot.slane %v1057, %v1066
  %v1069 = vunpack.c.l.s4 1966171168
  %v1070 = vunpack.c.0.s8 %v1069
  %v1071 = vlaneseq
  %v1072 = vshrl.u32 %v1071, 7
  %v1073 = vsub.s32 %v1070, %v1072
  %v1074 = vrot.slane %v1058, %v1073
  %v1076 = vunpack.c.l.s4 1966171168
  %v1077 = vunpack.c.0.s8 %v1076
  %v1078 = vlaneseq
  %v1079 = vshrl.u32 %v1078, 7
  %v1080 = vsub.s32 %v1077, %v1079
  %v1081 = vrot.slane %v1059, %v1080
  %v1083 = vunpack.c.l.s4 1966171168
  %v1084 = vunpack.c.0.s8 %v1083
  %v1085 = vlaneseq
  %v1086 = vshrl.u32 %v1085, 7
  %v1087 = vsub.s32 %v1084, %v1086
  %v1088 = vrot.slane %v1060, %v1087
  %v1089 = vcombine.low %v1067, %v1074
  %v1090 = vcombine.low %v1081, %v1088
  %v1092 = vunpack.c.l.s4 1966171168
  %v1093 = vunpack.c.0.s8 %v1092
  %v1094 = vlaneseq
  %v1095 = vshrl.u32 %v1094, 7
  %v1096 = vsub.s32 %v1093, %v1095
  %v1097 = vrot.slane %v1089, %v1096
  %v1099 = vunpack.c.l.s4 1966171168
  %v1100 = vunpack.c.0.s8 %v1099
  %v1101 = vlaneseq
  %v1102 = vshrl.u32 %v1101, 7
  %v1103 = vsub.s32 %v1100, %v1102
  %v1104 = vrot.slane %v1090, %v1103
  %v1105 = vcombine.low %v1097, %v1104
  %v1106 = vcombine.low %v478, %v482
  %v1107 = vcombine.low %v486, %v490
  %v1108 = vcombine.low %v494, %v498
  %v1109 = vcombine.low %v502, %v506
  %v1111 = vunpack.c.l.s4 1966171168
  %v1112 = vunpack.c.0.s8 %v1111
  %v1113 = vlaneseq
  %v1114 = vshrl.u32 %v1113, 7
  %v1115 = vsub.s32 %v1112, %v1114
  %v1116 = vrot.slane %v1106, %v1115
  %v1118 = vunpack.c.l.s4 1966171168
  %v1119 = vunpack.c.0.s8 %v1118
  %v1120 = vlaneseq
  %v1121 = vshrl.u32 %v1120, 7
  %v1122 = vsub.s32 %v1119, %v1121
  %v1123 = vrot.slane %v1107, %v1122
  %v1125 = vunpack.c.l.s4 1966171168
  %v1126 = vunpack.c.0.s8 %v1125
  %v1127 = vlaneseq
  %v1128 = vshrl.u32 %v1127, 7
  %v1129 = vsub.s32 %v1126, %v1128
  %v1130 = vrot.slane %v1108, %v1129
  %v1132 = vunpack.c.l.s4 1966171168
  %v1133 = vunpack.c.0.s8 %v1132
  %v1134 = vlaneseq
  %v1135 = vshrl.u32 %v1134, 7
  %v1136 = vsub.s32 %v1133, %v1135
  %v1137 = vrot.slane %v1109, %v1136
  %v1138 = vcombine.low %v1116, %v1123
  %v1139 = vcombine.low %v1130, %v1137
  %v1141 = vunpack.c.l.s4 1966171168
  %v1142 = vunpack.c.0.s8 %v1141
  %v1143 = vlaneseq
  %v1144 = vshrl.u32 %v1143, 7
  %v1145 = vsub.s32 %v1142, %v1144
  %v1146 = vrot.slane %v1138, %v1145
  %v1148 = vunpack.c.l.s4 1966171168
  %v1149 = vunpack.c.0.s8 %v1148
  %v1150 = vlaneseq
  %v1151 = vshrl.u32 %v1150, 7
  %v1152 = vsub.s32 %v1149, %v1151
  %v1153 = vrot.slane %v1139, %v1152
  %v1154 = vcombine.low %v1146, %v1153
  %v1155 = vcombine.low %v510, %v514
  %v1156 = vcombine.low %v518, %v522
  %v1157 = vcombine.low %v526, %v530
  %v1158 = vcombine.low %v534, %v538
  %v1160 = vunpack.c.l.s4 1966171168
  %v1161 = vunpack.c.0.s8 %v1160
  %v1162 = vlaneseq
  %v1163 = vshrl.u32 %v1162, 7
  %v1164 = vsub.s32 %v1161, %v1163
  %v1165 = vrot.slane %v1155, %v1164
  %v1167 = vunpack.c.l.s4 1966171168
  %v1168 = vunpack.c.0.s8 %v1167
  %v1169 = vlaneseq
  %v1170 = vshrl.u32 %v1169, 7
  %v1171 = vsub.s32 %v1168, %v1170
  %v1172 = vrot.slane %v1156, %v1171
  %v1174 = vunpack.c.l.s4 1966171168
  %v1175 = vunpack.c.0.s8 %v1174
  %v1176 = vlaneseq
  %v1177 = vshrl.u32 %v1176, 7
  %v1178 = vsub.s32 %v1175, %v1177
  %v1179 = vrot.slane %v1157, %v1178
  %v1181 = vunpack.c.l.s4 1966171168
  %v1182 = vunpack.c.0.s8 %v1181
  %v1183 = vlaneseq
  %v1184 = vshrl.u32 %v1183, 7
  %v1185 = vsub.s32 %v1182, %v1184
  %v1186 = vrot.slane %v1158, %v1185
  %v1187 = vcombine.low %v1165, %v1172
  %v1188 = vcombine.low %v1179, %v1186
  %v1190 = vunpack.c.l.s4 1966171168
  %v1191 = vunpack.c.0.s8 %v1190
  %v1192 = vlaneseq
  %v1193 = vshrl.u32 %v1192, 7
  %v1194 = vsub.s32 %v1191, %v1193
  %v1195 = vrot.slane %v1187, %v1194
  %v1197 = vunpack.c.l.s4 1966171168
  %v1198 = vunpack.c.0.s8 %v1197
  %v1199 = vlaneseq
  %v1200 = vshrl.u32 %v1199, 7
  %v1201 = vsub.s32 %v1198, %v1200
  %v1202 = vrot.slane %v1188, %v1201
  %v1203 = vcombine.low %v1195, %v1202
  %v1204 = vcombine.low %v542, %v546
  %v1205 = vcombine.low %v550, %v554
  %v1206 = vcombine.low %v558, %v562
  %v1207 = vcombine.low %v566, %v570
  %v1209 = vunpack.c.l.s4 1966171168
  %v1210 = vunpack.c.0.s8 %v1209
  %v1211 = vlaneseq
  %v1212 = vshrl.u32 %v1211, 7
  %v1213 = vsub.s32 %v1210, %v1212
  %v1214 = vrot.slane %v1204, %v1213
  %v1216 = vunpack.c.l.s4 1966171168
  %v1217 = vunpack.c.0.s8 %v1216
  %v1218 = vlaneseq
  %v1219 = vshrl.u32 %v1218, 7
  %v1220 = vsub.s32 %v1217, %v1219
  %v1221 = vrot.slane %v1205, %v1220
  %v1223 = vunpack.c.l.s4 1966171168
  %v1224 = vunpack.c.0.s8 %v1223
  %v1225 = vlaneseq
  %v1226 = vshrl.u32 %v1225, 7
  %v1227 = vsub.s32 %v1224, %v1226
  %v1228 = vrot.slane %v1206, %v1227
  %v1230 = vunpack.c.l.s4 1966171168
  %v1231 = vunpack.c.0.s8 %v1230
  %v1232 = vlaneseq
  %v1233 = vshrl.u32 %v1232, 7
  %v1234 = vsub.s32 %v1231, %v1233
  %v1235 = vrot.slane %v1207, %v1234
  %v1236 = vcombine.low %v1214, %v1221
  %v1237 = vcombine.low %v1228, %v1235
  %v1239 = vunpack.c.l.s4 1966171168
  %v1240 = vunpack.c.0.s8 %v1239
  %v1241 = vlaneseq
  %v1242 = vshrl.u32 %v1241, 7
  %v1243 = vsub.s32 %v1240, %v1242
  %v1244 = vrot.slane %v1236, %v1243
  %v1246 = vunpack.c.l.s4 1966171168
  %v1247 = vunpack.c.0.s8 %v1246
  %v1248 = vlaneseq
  %v1249 = vshrl.u32 %v1248, 7
  %v1250 = vsub.s32 %v1247, %v1249
  %v1251 = vrot.slane %v1237, %v1250
  %v1252 = vcombine.low %v1244, %v1251
  %v1253 = vcombine.low %v574, %v578
  %v1254 = vcombine.low %v582, %v586
  %v1255 = vcombine.low %v590, %v594
  %v1256 = vcombine.low %v598, %v602
  %v1258 = vunpack.c.l.s4 1966171168
  %v1259 = vunpack.c.0.s8 %v1258
  %v1260 = vlaneseq
  %v1261 = vshrl.u32 %v1260, 7
  %v1262 = vsub.s32 %v1259, %v1261
  %v1263 = vrot.slane %v1253, %v1262
  %v1265 = vunpack.c.l.s4 1966171168
  %v1266 = vunpack.c.0.s8 %v1265
  %v1267 = vlaneseq
  %v1268 = vshrl.u32 %v1267, 7
  %v1269 = vsub.s32 %v1266, %v1268
  %v1270 = vrot.slane %v1254, %v1269
  %v1272 = vunpack.c.l.s4 1966171168
  %v1273 = vunpack.c.0.s8 %v1272
  %v1274 = vlaneseq
  %v1275 = vshrl.u32 %v1274, 7
  %v1276 = vsub.s32 %v1273, %v1275
  %v1277 = vrot.slane %v1255, %v1276
  %v1279 = vunpack.c.l.s4 1966171168
  %v1280 = vunpack.c.0.s8 %v1279
  %v1281 = vlaneseq
  %v1282 = vshrl.u32 %v1281, 7
  %v1283 = vsub.s32 %v1280, %v1282
  %v1284 = vrot.slane %v1256, %v1283
  %v1285 = vcombine.low %v1263, %v1270
  %v1286 = vcombine.low %v1277, %v1284
  %v1288 = vunpack.c.l.s4 1966171168
  %v1289 = vunpack.c.0.s8 %v1288
  %v1290 = vlaneseq
  %v1291 = vshrl.u32 %v1290, 7
  %v1292 = vsub.s32 %v1289, %v1291
  %v1293 = vrot.slane %v1285, %v1292
  %v1295 = vunpack.c.l.s4 1966171168
  %v1296 = vunpack.c.0.s8 %v1295
  %v1297 = vlaneseq
  %v1298 = vshrl.u32 %v1297, 7
  %v1299 = vsub.s32 %v1296, %v1298
  %v1300 = vrot.slane %v1286, %v1299
  %v1301 = vcombine.low %v1293, %v1300
  %v1302 = vcombine.low %v606, %v610
  %v1303 = vcombine.low %v614, %v618
  %v1304 = vcombine.low %v622, %v626
  %v1305 = vcombine.low %v630, %v634
  %v1307 = vunpack.c.l.s4 1966171168
  %v1308 = vunpack.c.0.s8 %v1307
  %v1309 = vlaneseq
  %v1310 = vshrl.u32 %v1309, 7
  %v1311 = vsub.s32 %v1308, %v1310
  %v1312 = vrot.slane %v1302, %v1311
  %v1314 = vunpack.c.l.s4 1966171168
  %v1315 = vunpack.c.0.s8 %v1314
  %v1316 = vlaneseq
  %v1317 = vshrl.u32 %v1316, 7
  %v1318 = vsub.s32 %v1315, %v1317
  %v1319 = vrot.slane %v1303, %v1318
  %v1321 = vunpack.c.l.s4 1966171168
  %v1322 = vunpack.c.0.s8 %v1321
  %v1323 = vlaneseq
  %v1324 = vshrl.u32 %v1323, 7
  %v1325 = vsub.s32 %v1322, %v1324
  %v1326 = vrot.slane %v1304, %v1325
  %v1328 = vunpack.c.l.s4 1966171168
  %v1329 = vunpack.c.0.s8 %v1328
  %v1330 = vlaneseq
  %v1331 = vshrl.u32 %v1330, 7
  %v1332 = vsub.s32 %v1329, %v1331
  %v1333 = vrot.slane %v1305, %v1332
  %v1334 = vcombine.low %v1312, %v1319
  %v1335 = vcombine.low %v1326, %v1333
  %v1337 = vunpack.c.l.s4 1966171168
  %v1338 = vunpack.c.0.s8 %v1337
  %v1339 = vlaneseq
  %v1340 = vshrl.u32 %v1339, 7
  %v1341 = vsub.s32 %v1338, %v1340
  %v1342 = vrot.slane %v1334, %v1341
  %v1344 = vunpack.c.l.s4 1966171168
  %v1345 = vunpack.c.0.s8 %v1344
  %v1346 = vlaneseq
  %v1347 = vshrl.u32 %v1346, 7
  %v1348 = vsub.s32 %v1345, %v1347
  %v1349 = vrot.slane %v1335, %v1348
  %v1350 = vcombine.low %v1342, %v1349
  %v1351 = vcombine.low %v638, %v642
  %v1352 = vcombine.low %v646, %v650
  %v1353 = vcombine.low %v654, %v658
  %v1354 = vcombine.low %v662, %v666
  %v1356 = vunpack.c.l.s4 1966171168
  %v1357 = vunpack.c.0.s8 %v1356
  %v1358 = vlaneseq
  %v1359 = vshrl.u32 %v1358, 7
  %v1360 = vsub.s32 %v1357, %v1359
  %v1361 = vrot.slane %v1351, %v1360
  %v1363 = vunpack.c.l.s4 1966171168
  %v1364 = vunpack.c.0.s8 %v1363
  %v1365 = vlaneseq
  %v1366 = vshrl.u32 %v1365, 7
  %v1367 = vsub.s32 %v1364, %v1366
  %v1368 = vrot.slane %v1352, %v1367
  %v1370 = vunpack.c.l.s4 1966171168
  %v1371 = vunpack.c.0.s8 %v1370
  %v1372 = vlaneseq
  %v1373 = vshrl.u32 %v1372, 7
  %v1374 = vsub.s32 %v1371, %v1373
  %v1375 = vrot.slane %v1353, %v1374
  %v1377 = vunpack.c.l.s4 1966171168
  %v1378 = vunpack.c.0.s8 %v1377
  %v1379 = vlaneseq
  %v1380 = vshrl.u32 %v1379, 7
  %v1381 = vsub.s32 %v1378, %v1380
  %v1382 = vrot.slane %v1354, %v1381
  %v1383 = vcombine.low %v1361, %v1368
  %v1384 = vcombine.low %v1375, %v1382
  %v1386 = vunpack.c.l.s4 1966171168
  %v1387 = vunpack.c.0.s8 %v1386
  %v1388 = vlaneseq
  %v1389 = vshrl.u32 %v1388, 7
  %v1390 = vsub.s32 %v1387, %v1389
  %v1391 = vrot.slane %v1383, %v1390
  %v1393 = vunpack.c.l.s4 1966171168
  %v1394 = vunpack.c.0.s8 %v1393
  %v1395 = vlaneseq
  %v1396 = vshrl.u32 %v1395, 7
  %v1397 = vsub.s32 %v1394, %v1396
  %v1398 = vrot.slane %v1384, %v1397
  %v1399 = vcombine.low %v1391, %v1398
  %v1400 = vcombine.low %v670, %v674
  %v1401 = vcombine.low %v678, %v682
  %v1402 = vcombine.low %v686, %v690
  %v1403 = vcombine.low %v694, %v698
  %v1405 = vunpack.c.l.s4 1966171168
  %v1406 = vunpack.c.0.s8 %v1405
  %v1407 = vlaneseq
  %v1408 = vshrl.u32 %v1407, 7
  %v1409 = vsub.s32 %v1406, %v1408
  %v1410 = vrot.slane %v1400, %v1409
  %v1412 = vunpack.c.l.s4 1966171168
  %v1413 = vunpack.c.0.s8 %v1412
  %v1414 = vlaneseq
  %v1415 = vshrl.u32 %v1414, 7
  %v1416 = vsub.s32 %v1413, %v1415
  %v1417 = vrot.slane %v1401, %v1416
  %v1419 = vunpack.c.l.s4 1966171168
  %v1420 = vunpack.c.0.s8 %v1419
  %v1421 = vlaneseq
  %v1422 = vshrl.u32 %v1421, 7
  %v1423 = vsub.s32 %v1420, %v1422
  %v1424 = vrot.slane %v1402, %v1423
  %v1426 = vunpack.c.l.s4 1966171168
  %v1427 = vunpack.c.0.s8 %v1426
  %v1428 = vlaneseq
  %v1429 = vshrl.u32 %v1428, 7
  %v1430 = vsub.s32 %v1427, %v1429
  %v1431 = vrot.slane %v1403, %v1430
  %v1432 = vcombine.low %v1410, %v1417
  %v1433 = vcombine.low %v1424, %v1431
  %v1435 = vunpack.c.l.s4 1966171168
  %v1436 = vunpack.c.0.s8 %v1435
  %v1437 = vlaneseq
  %v1438 = vshrl.u32 %v1437, 7
  %v1439 = vsub.s32 %v1436, %v1438
  %v1440 = vrot.slane %v1432, %v1439
  %v1442 = vunpack.c.l.s4 1966171168
  %v1443 = vunpack.c.0.s8 %v1442
  %v1444 = vlaneseq
  %v1445 = vshrl.u32 %v1444, 7
  %v1446 = vsub.s32 %v1443, %v1445
  %v1447 = vrot.slane %v1433, %v1446
  %v1448 = vcombine.low %v1440, %v1447
  %v1449 = vcombine.low %v702, %v706
  %v1450 = vcombine.low %v710, %v714
  %v1451 = vcombine.low %v718, %v722
  %v1452 = vcombine.low %v726, %v730
  %v1454 = vunpack.c.l.s4 1966171168
  %v1455 = vunpack.c.0.s8 %v1454
  %v1456 = vlaneseq
  %v1457 = vshrl.u32 %v1456, 7
  %v1458 = vsub.s32 %v1455, %v1457
  %v1459 = vrot.slane %v1449, %v1458
  %v1461 = vunpack.c.l.s4 1966171168
  %v1462 = vunpack.c.0.s8 %v1461
  %v1463 = vlaneseq
  %v1464 = vshrl.u32 %v1463, 7
  %v1465 = vsub.s32 %v1462, %v1464
  %v1466 = vrot.slane %v1450, %v1465
  %v1468 = vunpack.c.l.s4 1966171168
  %v1469 = vunpack.c.0.s8 %v1468
  %v1470 = vlaneseq
  %v1471 = vshrl.u32 %v1470, 7
  %v1472 = vsub.s32 %v1469, %v1471
  %v1473 = vrot.slane %v1451, %v1472
  %v1475 = vunpack.c.l.s4 1966171168
  %v1476 = vunpack.c.0.s8 %v1475
  %v1477 = vlaneseq
  %v1478 = vshrl.u32 %v1477, 7
  %v1479 = vsub.s32 %v1476, %v1478
  %v1480 = vrot.slane %v1452, %v1479
  %v1481 = vcombine.low %v1459, %v1466
  %v1482 = vcombine.low %v1473, %v1480
  %v1484 = vunpack.c.l.s4 1966171168
  %v1485 = vunpack.c.0.s8 %v1484
  %v1486 = vlaneseq
  %v1487 = vshrl.u32 %v1486, 7
  %v1488 = vsub.s32 %v1485, %v1487
  %v1489 = vrot.slane %v1481, %v1488
  %v1491 = vunpack.c.l.s4 1966171168
  %v1492 = vunpack.c.0.s8 %v1491
  %v1493 = vlaneseq
  %v1494 = vshrl.u32 %v1493, 7
  %v1495 = vsub.s32 %v1492, %v1494
  %v1496 = vrot.slane %v1482, %v1495
  %v1497 = vcombine.low %v1489, %v1496
  %v1498 = vcombine.low %v734, %v738
  %v1499 = vcombine.low %v742, %v746
  %v1500 = vcombine.low %v750, %v754
  %v1501 = vcombine.low %v758, %v762
  %v1503 = vunpack.c.l.s4 1966171168
  %v1504 = vunpack.c.0.s8 %v1503
  %v1505 = vlaneseq
  %v1506 = vshrl.u32 %v1505, 7
  %v1507 = vsub.s32 %v1504, %v1506
  %v1508 = vrot.slane %v1498, %v1507
  %v1510 = vunpack.c.l.s4 1966171168
  %v1511 = vunpack.c.0.s8 %v1510
  %v1512 = vlaneseq
  %v1513 = vshrl.u32 %v1512, 7
  %v1514 = vsub.s32 %v1511, %v1513
  %v1515 = vrot.slane %v1499, %v1514
  %v1517 = vunpack.c.l.s4 1966171168
  %v1518 = vunpack.c.0.s8 %v1517
  %v1519 = vlaneseq
  %v1520 = vshrl.u32 %v1519, 7
  %v1521 = vsub.s32 %v1518, %v1520
  %v1522 = vrot.slane %v1500, %v1521
  %v1524 = vunpack.c.l.s4 1966171168
  %v1525 = vunpack.c.0.s8 %v1524
  %v1526 = vlaneseq
  %v1527 = vshrl.u32 %v1526, 7
  %v1528 = vsub.s32 %v1525, %v1527
  %v1529 = vrot.slane %v1501, %v1528
  %v1530 = vcombine.low %v1508, %v1515
  %v1531 = vcombine.low %v1522, %v1529
  %v1533 = vunpack.c.l.s4 1966171168
  %v1534 = vunpack.c.0.s8 %v1533
  %v1535 = vlaneseq
  %v1536 = vshrl.u32 %v1535, 7
  %v1537 = vsub.s32 %v1534, %v1536
  %v1538 = vrot.slane %v1530, %v1537
  %v1540 = vunpack.c.l.s4 1966171168
  %v1541 = vunpack.c.0.s8 %v1540
  %v1542 = vlaneseq
  %v1543 = vshrl.u32 %v1542, 7
  %v1544 = vsub.s32 %v1541, %v1543
  %v1545 = vrot.slane %v1531, %v1544
  %v1546 = vcombine.low %v1538, %v1545
  %1547 = vset.pattern.permute.xlu0 0
  %1548 = vperm.xlu0 %1547, %v811
  %v1549 = vpop.permute.xlu0 %1548
  %1550 = vset.pattern.permute.xlu0 0
  %1551 = vperm.xlu0 %1550, %v860
  %v1552 = vpop.permute.xlu0 %1551
  %1553 = vset.pattern.permute.xlu0 0
  %1554 = vperm.xlu0 %1553, %v909
  %v1555 = vpop.permute.xlu0 %1554
  %1556 = vset.pattern.permute.xlu0 0
  %1557 = vperm.xlu0 %1556, %v958
  %v1558 = vpop.permute.xlu0 %1557
  %1559 = vset.pattern.permute.xlu0 0
  %1560 = vperm.xlu0 %1559, %v1007
  %v1561 = vpop.permute.xlu0 %1560
  %1562 = vset.pattern.permute.xlu0 0
  %1563 = vperm.xlu0 %1562, %v1056
  %v1564 = vpop.permute.xlu0 %1563
  %1565 = vset.pattern.permute.xlu0 0
  %1566 = vperm.xlu0 %1565, %v1105
  %v1567 = vpop.permute.xlu0 %1566
  %1568 = vset.pattern.permute.xlu0 0
  %1569 = vperm.xlu0 %1568, %v1154
  %v1570 = vpop.permute.xlu0 %1569
  %1571 = vset.pattern.permute.xlu0 0
  %1572 = vperm.xlu0 %1571, %v1203
  %v1573 = vpop.permute.xlu0 %1572
  %1574 = vset.pattern.permute.xlu0 0
  %1575 = vperm.xlu0 %1574, %v1252
  %v1576 = vpop.permute.xlu0 %1575
  %1577 = vset.pattern.permute.xlu0 0
  %1578 = vperm.xlu0 %1577, %v1301
  %v1579 = vpop.permute.xlu0 %1578
  %1580 = vset.pattern.permute.xlu0 0
  %1581 = vperm.xlu0 %1580, %v1350
  %v1582 = vpop.permute.xlu0 %1581
  %1583 = vset.pattern.permute.xlu0 0
  %1584 = vperm.xlu0 %1583, %v1399
  %v1585 = vpop.permute.xlu0 %1584
  %1586 = vset.pattern.permute.xlu0 0
  %1587 = vperm.xlu0 %1586, %v1448
  %v1588 = vpop.permute.xlu0 %1587
  %1589 = vset.pattern.permute.xlu0 0
  %1590 = vperm.xlu0 %1589, %v1497
  %v1591 = vpop.permute.xlu0 %1590
  %1592 = vset.pattern.permute.xlu0 0
  %1593 = vperm.xlu0 %1592, %v1546
  %v1594 = vpop.permute.xlu0 %1593
  %v1595 = vlaneseq
  %v1596 = vand.u32 %v1595, 127
  %v1597 = vlaneseq
  %v1598 = vshrl.u32 %v1597, 7
  %v1599 = vsub.s32 %v1596, %v1598
  %v1600 = vrot.slane %v1549, %v1599
  %v1601 = vadd.s32 %v1596, 4294967288
  %v1602 = vlaneseq
  %v1603 = vshrl.u32 %v1602, 7
  %v1604 = vsub.s32 %v1601, %v1603
  %v1605 = vrot.slane %v1552, %v1604
  %vm1606 = vcmask 130112
  %v1607 = vsel %vm1606, %v1605, %v1600
  %v1608 = vadd.s32 %v1596, 4294967280
  %v1609 = vlaneseq
  %v1610 = vshrl.u32 %v1609, 7
  %v1611 = vsub.s32 %v1608, %v1610
  %v1612 = vrot.slane %v1555, %v1611
  %vm1613 = vcmask 195712
  %v1614 = vsel %vm1613, %v1612, %v1607
  %v1615 = vadd.s32 %v1596, 4294967272
  %v1616 = vlaneseq
  %v1617 = vshrl.u32 %v1616, 7
  %v1618 = vsub.s32 %v1615, %v1617
  %v1619 = vrot.slane %v1558, %v1618
  %vm1620 = vcmask 261312
  %v1621 = vsel %vm1620, %v1619, %v1614
  %v1622 = vadd.s32 %v1596, 4294967264
  %v1623 = vlaneseq
  %v1624 = vshrl.u32 %v1623, 7
  %v1625 = vsub.s32 %v1622, %v1624
  %v1626 = vrot.slane %v1561, %v1625
  %vm1627 = vcmask 326912
  %v1628 = vsel %vm1627, %v1626, %v1621
  %v1629 = vadd.s32 %v1596, 4294967256
  %v1630 = vlaneseq
  %v1631 = vshrl.u32 %v1630, 7
  %v1632 = vsub.s32 %v1629, %v1631
  %v1633 = vrot.slane %v1564, %v1632
  %vm1634 = vcmask 392512
  %v1635 = vsel %vm1634, %v1633, %v1628
  %v1636 = vadd.s32 %v1596, 4294967248
  %v1637 = vlaneseq
  %v1638 = vshrl.u32 %v1637, 7
  %v1639 = vsub.s32 %v1636, %v1638
  %v1640 = vrot.slane %v1567, %v1639
  %vm1641 = vcmask 458112
  %v1642 = vsel %vm1641, %v1640, %v1635
  %v1643 = vadd.s32 %v1596, 4294967240
  %v1644 = vlaneseq
  %v1645 = vshrl.u32 %v1644, 7
  %v1646 = vsub.s32 %v1643, %v1645
  %v1647 = vrot.slane %v1570, %v1646
  %vm1648 = vcmask 523712
  %v1649 = vsel %vm1648, %v1647, %v1642
  %v1650 = vadd.s32 %v1596, 4294967232
  %v1651 = vlaneseq
  %v1652 = vshrl.u32 %v1651, 7
  %v1653 = vsub.s32 %v1650, %v1652
  %v1654 = vrot.slane %v1573, %v1653
  %vm1655 = vcmask 589312
  %v1656 = vsel %vm1655, %v1654, %v1649
  %v1657 = vadd.s32 %v1596, 4294967224
  %v1658 = vlaneseq
  %v1659 = vshrl.u32 %v1658, 7
  %v1660 = vsub.s32 %v1657, %v1659
  %v1661 = vrot.slane %v1576, %v1660
  %vm1662 = vcmask 654912
  %v1663 = vsel %vm1662, %v1661, %v1656
  %v1664 = vadd.s32 %v1596, 4294967216
  %v1665 = vlaneseq
  %v1666 = vshrl.u32 %v1665, 7
  %v1667 = vsub.s32 %v1664, %v1666
  %v1668 = vrot.slane %v1579, %v1667
  %vm1669 = vcmask 720512
  %v1670 = vsel %vm1669, %v1668, %v1663
  %v1671 = vadd.s32 %v1596, 4294967208
  %v1672 = vlaneseq
  %v1673 = vshrl.u32 %v1672, 7
  %v1674 = vsub.s32 %v1671, %v1673
  %v1675 = vrot.slane %v1582, %v1674
  %vm1676 = vcmask 786112
  %v1677 = vsel %vm1676, %v1675, %v1670
  %v1678 = vadd.s32 %v1596, 4294967200
  %v1679 = vlaneseq
  %v1680 = vshrl.u32 %v1679, 7
  %v1681 = vsub.s32 %v1678, %v1680
  %v1682 = vrot.slane %v1585, %v1681
  %vm1683 = vcmask 851712
  %v1684 = vsel %vm1683, %v1682, %v1677
  %v1685 = vadd.s32 %v1596, 4294967192
  %v1686 = vlaneseq
  %v1687 = vshrl.u32 %v1686, 7
  %v1688 = vsub.s32 %v1685, %v1687
  %v1689 = vrot.slane %v1588, %v1688
  %vm1690 = vcmask 917312
  %v1691 = vsel %vm1690, %v1689, %v1684
  %v1692 = vadd.s32 %v1596, 4294967184
  %v1693 = vlaneseq
  %v1694 = vshrl.u32 %v1693, 7
  %v1695 = vsub.s32 %v1692, %v1694
  %v1696 = vrot.slane %v1591, %v1695
  %vm1697 = vcmask 982912
  %v1698 = vsel %vm1697, %v1696, %v1691
  %v1699 = vadd.s32 %v1596, 4294967176
  %v1700 = vlaneseq
  %v1701 = vshrl.u32 %v1700, 7
  %v1702 = vsub.s32 %v1699, %v1701
  %v1703 = vrot.slane %v1594, %v1702
  %vm1704 = vcmask 1048512
  %v1705 = vsel %vm1704, %v1703, %v1698
  %v1707 = vunpack.c.l.s4 1966171168
  %v1708 = vunpack.c.0.s8 %v1707
  %v1709 = vlaneseq
  %v1710 = vshrl.u32 %v1709, 7
  %v1711 = vsub.s32 %v1708, %v1710
  %v1712 = vrot.slane %v1705, %v1711
  %v1714 = vunpack.c.l.s4 1966171168
  %v1715 = vunpack.c.0.s8 %v1714
  %v1716 = vlaneseq
  %v1717 = vshrl.u32 %v1716, 7
  %v1718 = vsub.s32 %v1715, %v1717
  %v1719 = vrot.slane %v1712, %v1718
  %v1721 = vadd.f32 %v234, %v1719
  %1722 = vst [vmem:[%s5] sm:$0x1] %v1721
  // Predicated region
  $region80: #{lfm_forward.1} parent=0 // pred_check
    _
  $region81: #{lfm_forward.1} parent=0 // pred_check_branch
    %1724 = sbr.rel (0) target = $region83
  $region82: #{lfm_forward.1} parent=0 // pred_region
    _
  $region83: #{lfm_forward.1} parent=0 // pred_fallthru
    _
  // Predicated region
  $region84: #{lfm_forward.1} parent=0 // pred_check
    _
  $region85: #{lfm_forward.1} parent=0 // pred_check_branch
    %1726 = sbr.rel (0) target = $region87
  $region86: #{lfm_forward.1} parent=0 // pred_region
    _
  $region87: #{lfm_forward.1} parent=0 // pred_fallthru
    _
  %1727 = vsyncmov [#allocation4]
  %s1728 = vpop.sfrf %1727
  %p1729 = scmp.eq.s32.totalorder %s1728, 0
  %p1730 = pneg %p1729
  %1732 = shalt.err (%p1730)
  %s1733 = scalar_lea.sflag [#allocation4], 1
  %1734 = vsyncmov %s1733
  %s1735 = vpop.sfrf %1734
  %p1736 = scmp.eq.s32.totalorder %s1735, 0
  %p1737 = pneg %p1736
  %1739 = shalt.err (%p1737)

</llo_original>
